<compile_context>
chip_gen: v7x
topology: tpu7x:2x2x1
jax: 0.10.0
libtpu: 0.0.40
codegen_flags: <defaults>
</compile_context>

<pallas_src>
import functools

import jax
import jax.numpy as jnp
from jax.experimental import pallas as pl
from jax.experimental.pallas import tpu as pltpu


def _downsample_kernel(x_ref, h_ref, w_ref, b_ref, o_ref, acc_ref, *, TH, Wo):
    # x_ref  : [2*TH, Wp, C]  padded input rows for this tile (native dtype)
    # h_ref  : [Wp, C]        halo row = padded row 2*(r0 + TH)
    # w_ref  : [3, 3, C, C]   HWIO weights (native dtype, resident across steps)
    # b_ref  : [1, C]         bias
    # o_ref  : [TH, Wo, C]    output tile
    # acc_ref: [TH, Wo, C]    f32 VMEM scratch accumulator
    C = o_ref.shape[-1]

    # Initialize the accumulator with the bias (saves one full add pass).
    acc_ref[...] = jnp.broadcast_to(b_ref[...].astype(jnp.float32), (TH, Wo, C))

    def tap_dot(patch, kh, kw):
        # [TH, Wo, Cin] x [Cin, Cout] -> [TH, Wo, Cout], accumulated in f32.
        acc_ref[...] += jax.lax.dot_general(
            patch,
            w_ref[kh, kw],
            dimension_numbers=(((2,), (0,)), ((), ())),
            preferred_element_type=jnp.float32,
        )

    for kw in range(3):
        # kh = 0 tap: padded rows 0, 2, ..., 2*(TH-1); stride-2 window read
        # directly from VMEM in native dtype.
        t0 = x_ref[pl.ds(0, TH, stride=2), pl.ds(kw, Wo, stride=2), :]
        tap_dot(t0, 0, kw)

        # kh = 2 tap: padded rows 2, 4, ..., 2*TH. Reuse the kh=0 load shifted by
        # one output row; the final row comes from the halo input.
        h_row = h_ref[pl.ds(kw, Wo, stride=2), :][None]           # [1, Wo, C]
        if TH > 1:
            t2 = jnp.concatenate([t0[1:], h_row], axis=0)          # [TH, Wo, C]
        else:
            t2 = h_row
        tap_dot(t2, 2, kw)

        # kh = 1 tap: padded rows 1, 3, ..., 2*TH - 1.
        t1 = x_ref[pl.ds(1, TH, stride=2), pl.ds(kw, Wo, stride=2), :]
        tap_dot(t1, 1, kw)

    o_ref[...] = acc_ref[...].astype(o_ref.dtype)


def _pick_tile_rows(Ho, Wp, C, itemsize):
    """Largest divisor of Ho whose double-buffered input slab fits a VMEM budget."""
    budget = 6 * 1024 * 1024            # bytes for the (double-buffered) input slab
    per_row = 2 * Wp * C * itemsize     # two padded input rows feed one output row
    th = max(1, min(Ho, budget // max(2 * per_row, 1)))
    while Ho % th:
        th -= 1
    if th == Ho and Ho >= 2:
        # Keep >= 2 spatial tiles so both v7x TensorCores have work even at B == 1.
        th = Ho // 2
        while Ho % th:
            th -= 1
    return th


def downsample(x_nchw, w_pt, b_pt):
    """Pallas equivalent of nn.Conv2d(C, C, 3, stride=2, padding=1)(x).

    x_nchw: [B, C, H, W]   (PyTorch NCHW)
    w_pt  : [C, C, 3, 3]   (PyTorch OIHW)
    b_pt  : [C]
    returns [B, C, ceil(H/2), ceil(W/2)] in NCHW.
    """
    B, C, H, W = x_nchw.shape
    Ho = (H - 1) // 2 + 1
    Wo = (W - 1) // 2 + 1
    Hp, Wp = H + 2, W + 2

    # Glue: NCHW -> NHWC + 1px zero pad.
    # TODO(synk): fold pad/transpose into the kernel with boundary masking to drop
    # this extra HBM round-trip on memory-bound layers.
    x = jnp.transpose(x_nchw, (0, 2, 3, 1))
    x_pad = jnp.pad(x, ((0, 0), (1, 1), (1, 1), (0, 0)))
    # OIHW -> HWIO, pre-cast to the activation dtype (native MXU path, half VMEM).
    w = jnp.transpose(w_pt, (2, 3, 1, 0)).astype(x.dtype)
    b = b_pt.reshape(1, C)

    itemsize = jnp.dtype(x.dtype).itemsize
    TH = _pick_tile_rows(Ho, Wp, C, itemsize)
    nH = Ho // TH

    # Bottom halo row of every tile: padded row 2*TH*(r+1), r = 0..nH-1 -> [B, nH, Wp, C].
    halo = x_pad[:, 2 * TH : 2 * Ho + 1 : 2 * TH, :, :]

    # Explicit VMEM budget: double-buffered blocks + f32 accumulator + slack.
    vmem_bytes = 2 * (2 * TH * Wp * C + Wp * C + TH * Wo * C + 9 * C * C) * itemsize
    vmem_bytes += TH * Wo * C * 4 + (4 << 20)
    vmem_bytes = int(min(64 << 20, max(32 << 20, vmem_bytes)))

    kernel = functools.partial(_downsample_kernel, TH=TH, Wo=Wo)

    out_nhwc = pl.pallas_call(
        kernel,
        out_shape=jax.ShapeDtypeStruct((B, Ho, Wo, C), x_nchw.dtype),
        grid=(B, nH),
        in_specs=[
            pl.BlockSpec((None, 2 * TH, Wp, C), lambda b_, r: (b_, r, 0, 0)),
            pl.BlockSpec((None, None, Wp, C), lambda b_, r: (b_, r, 0, 0)),
            pl.BlockSpec((3, 3, C, C), lambda b_, r: (0, 0, 0, 0)),
            pl.BlockSpec((1, C), lambda b_, r: (0, 0)),
        ],
        out_specs=pl.BlockSpec((None, TH, Wo, C), lambda b_, r: (b_, r, 0, 0)),
        scratch_shapes=[pltpu.VMEM((TH, Wo, C), jnp.float32)],
        compiler_params=pltpu.CompilerParams(
            dimension_semantics=("parallel", "parallel"),
            vmem_limit_bytes=vmem_bytes,
        ),
    )(x_pad, halo, w, b)

    # Glue: NHWC -> NCHW.
    return jnp.transpose(out_nhwc, (0, 3, 1, 2))


if __name__ == "__main__":
    B, C, H, W = 2, 4, 16, 16

    key = jax.random.PRNGKey(0)
    kx, kw, kb = jax.random.split(key, 3)
    x = jax.random.normal(kx, (B, C, H, W), dtype=jnp.float32)
    # Deterministic synthetic parameters (Conv2d(C, C, 3) shapes).
    w = jax.random.normal(kw, (C, C, 3, 3), dtype=jnp.float32) * 0.1
    b = jax.random.normal(kb, (C,), dtype=jnp.float32) * 0.1

    out = downsample(x, w, b)
    out = jax.block_until_ready(out)

    # Pure-JAX reference (same semantics as F.conv2d NCHW, stride=2, pad=1).
    ref = jax.lax.conv_general_dilated(
        x, w, window_strides=(2, 2), padding=((1, 1), (1, 1)),
        dimension_numbers=("NCHW", "OIHW", "NCHW"),
    ) + b[None, :, None, None]

    assert out.shape == (B, C, H // 2, W // 2), out.shape
    assert jnp.allclose(out, ref, atol=1e-4, rtol=1e-4), float(
        jnp.max(jnp.abs(out - ref)))

    print("KERNEL_OK")
</pallas_src>

<mosaic_0001>
module attributes {stable_mosaic.version = 11 : i64} {
  func.func @_downsample_kernel(%arg0: i32, %arg1: i32, %arg2: memref<1x8x18x4xf32, #tpu.memory_space<vmem>>, %arg3: memref<1x1x18x4xf32, #tpu.memory_space<vmem>>, %arg4: memref<3x3x4x4xf32, #tpu.memory_space<vmem>>, %arg5: memref<1x4xf32, #tpu.memory_space<vmem>>, %arg6: memref<1x4x8x4xf32, #tpu.memory_space<vmem>>, %arg7: memref<4x8x4xf32, #tpu.memory_space<vmem>>) attributes {dimension_semantics = [#tpu.dimension_semantics<parallel>, #tpu.dimension_semantics<parallel>], iteration_bounds = array<i64: 2, 2>, scalar_prefetch = 0 : i64, scratch_operands = 1 : i64, tpu.core_type = #tpu.core_type<tc>, window_params = [{transform_indices = @transform_0, window_bounds = array<i64: 1, 8, 18, 4>}, {transform_indices = @transform_1, window_bounds = array<i64: 1, 1, 18, 4>}, {pipeline_mode = #tpu.pipeline_mode<synchronous>, transform_indices = @transform_2, window_bounds = array<i64: 3, 3, 4, 4>}, {pipeline_mode = #tpu.pipeline_mode<synchronous>, transform_indices = @transform_3, window_bounds = array<i64: 1, 4>}, {transform_indices = @transform_4, window_bounds = array<i64: 1, 4, 8, 4>}]} {
    %c0 = arith.constant 0 : index
    %c0_0 = arith.constant 0 : index
    %0 = vector.load %arg5[%c0, %c0_0] : memref<1x4xf32, #tpu.memory_space<vmem>>, vector<1x4xf32>
    %1 = vector.shape_cast %0 : vector<1x4xf32> to vector<1x1x4xf32>
    %2 = vector.broadcast %1 : vector<1x1x4xf32> to vector<4x8x4xf32>
    %c0_1 = arith.constant 0 : index
    %c0_2 = arith.constant 0 : index
    %c0_3 = arith.constant 0 : index
    %3 = vector.load %arg7[%c0_1, %c0_2, %c0_3] : memref<4x8x4xf32, #tpu.memory_space<vmem>>, vector<4x8x4xf32>
    tpu.vector_store %arg7[%c0_1, %c0_2, %c0_3], %2 {strides = array<i32>} : memref<4x8x4xf32, #tpu.memory_space<vmem>>, vector<4x8x4xf32>,
    %c0_4 = arith.constant 0 : index
    %c0_5 = arith.constant 0 : index
    %c0_6 = arith.constant 0 : index
    %c0_7 = arith.constant 0 : index
    %4 = tpu.strided_load %arg2[%c0_4, %c0_5, %c0_6, %c0_7] {strides = array<i32: 1, 2, 2, 1>} : memref<1x8x18x4xf32, #tpu.memory_space<vmem>>, vector<1x4x8x4xf32>
    %5 = vector.shape_cast %4 : vector<1x4x8x4xf32> to vector<4x8x4xf32>
    %c0_8 = arith.constant 0 : index
    %c0_9 = arith.constant 0 : index
    %c0_10 = arith.constant 0 : index
    %6 = vector.load %arg7[%c0_8, %c0_9, %c0_10] : memref<4x8x4xf32, #tpu.memory_space<vmem>>, vector<4x8x4xf32>
    %c0_11 = arith.constant 0 : index
    %c0_12 = arith.constant 0 : index
    %c0_13 = arith.constant 0 : index
    %c0_14 = arith.constant 0 : index
    %7 = vector.load %arg4[%c0_11, %c0_12, %c0_13, %c0_14] : memref<3x3x4x4xf32, #tpu.memory_space<vmem>>, vector<1x1x4x4xf32>
    %8 = vector.shape_cast %7 : vector<1x1x4x4xf32> to vector<4x4xf32>
    %cst = arith.constant dense<0.000000e+00> : vector<4x8x4xf32>
    %9 = tpu.matmul %5, %8, %cst {dimension_numbers = #tpu.dot_dimension_numbers<[2], [0], [0, 1], [1], [0, 0, 0, 1, 1, 1], [], []>} : vector<4x8x4xf32>, vector<4x4xf32>, vector<4x8x4xf32> -> vector<4x8x4xf32>
    %10 = arith.addf %6, %9 : vector<4x8x4xf32>
    %c0_15 = arith.constant 0 : index
    %c0_16 = arith.constant 0 : index
    %c0_17 = arith.constant 0 : index
    %11 = vector.load %arg7[%c0_15, %c0_16, %c0_17] : memref<4x8x4xf32, #tpu.memory_space<vmem>>, vector<4x8x4xf32>
    tpu.vector_store %arg7[%c0_15, %c0_16, %c0_17], %10 {strides = array<i32>} : memref<4x8x4xf32, #tpu.memory_space<vmem>>, vector<4x8x4xf32>,
    %c0_18 = arith.constant 0 : index
    %c0_19 = arith.constant 0 : index
    %c0_20 = arith.constant 0 : index
    %c0_21 = arith.constant 0 : index
    %12 = tpu.strided_load %arg3[%c0_18, %c0_19, %c0_20, %c0_21] {strides = array<i32: 1, 1, 2, 1>} : memref<1x1x18x4xf32, #tpu.memory_space<vmem>>, vector<1x1x8x4xf32>
    %13 = vector.shape_cast %12 : vector<1x1x8x4xf32> to vector<8x4xf32>
    %14 = vector.shape_cast %13 : vector<8x4xf32> to vector<1x8x4xf32>
    %15 = vector.extract_strided_slice %5 {offsets = [1, 0, 0], sizes = [3, 8, 4], strides = [1, 1, 1]} : vector<4x8x4xf32> to vector<3x8x4xf32>
    %16 = tpu.concatenate %15, %14 in 0 : vector<3x8x4xf32>, vector<1x8x4xf32> -> vector<4x8x4xf32>
    %c0_22 = arith.constant 0 : index
    %c0_23 = arith.constant 0 : index
    %c0_24 = arith.constant 0 : index
    %17 = vector.load %arg7[%c0_22, %c0_23, %c0_24] : memref<4x8x4xf32, #tpu.memory_space<vmem>>, vector<4x8x4xf32>
    %c2 = arith.constant 2 : index
    %c0_25 = arith.constant 0 : index
    %c0_26 = arith.constant 0 : index
    %c0_27 = arith.constant 0 : index
    %18 = vector.load %arg4[%c2, %c0_25, %c0_26, %c0_27] : memref<3x3x4x4xf32, #tpu.memory_space<vmem>>, vector<1x1x4x4xf32>
    %19 = vector.shape_cast %18 : vector<1x1x4x4xf32> to vector<4x4xf32>
    %cst_28 = arith.constant dense<0.000000e+00> : vector<4x8x4xf32>
    %20 = tpu.matmul %16, %19, %cst_28 {dimension_numbers = #tpu.dot_dimension_numbers<[2], [0], [0, 1], [1], [0, 0, 0, 1, 1, 1], [], []>} : vector<4x8x4xf32>, vector<4x4xf32>, vector<4x8x4xf32> -> vector<4x8x4xf32>
    %21 = arith.addf %17, %20 : vector<4x8x4xf32>
    %c0_29 = arith.constant 0 : index
    %c0_30 = arith.constant 0 : index
    %c0_31 = arith.constant 0 : index
    %22 = vector.load %arg7[%c0_29, %c0_30, %c0_31] : memref<4x8x4xf32, #tpu.memory_space<vmem>>, vector<4x8x4xf32>
    tpu.vector_store %arg7[%c0_29, %c0_30, %c0_31], %21 {strides = array<i32>} : memref<4x8x4xf32, #tpu.memory_space<vmem>>, vector<4x8x4xf32>,
    %c0_32 = arith.constant 0 : index
    %c1 = arith.constant 1 : index
    %c0_33 = arith.constant 0 : index
    %c0_34 = arith.constant 0 : index
    %23 = tpu.strided_load %arg2[%c0_32, %c1, %c0_33, %c0_34] {strides = array<i32: 1, 2, 2, 1>} : memref<1x8x18x4xf32, #tpu.memory_space<vmem>>, vector<1x4x8x4xf32>
    %24 = vector.shape_cast %23 : vector<1x4x8x4xf32> to vector<4x8x4xf32>
    %c0_35 = arith.constant 0 : index
    %c0_36 = arith.constant 0 : index
    %c0_37 = arith.constant 0 : index
    %25 = vector.load %arg7[%c0_35, %c0_36, %c0_37] : memref<4x8x4xf32, #tpu.memory_space<vmem>>, vector<4x8x4xf32>
    %c1_38 = arith.constant 1 : index
    %c0_39 = arith.constant 0 : index
    %c0_40 = arith.constant 0 : index
    %c0_41 = arith.constant 0 : index
    %26 = vector.load %arg4[%c1_38, %c0_39, %c0_40, %c0_41] : memref<3x3x4x4xf32, #tpu.memory_space<vmem>>, vector<1x1x4x4xf32>
    %27 = vector.shape_cast %26 : vector<1x1x4x4xf32> to vector<4x4xf32>
    %cst_42 = arith.constant dense<0.000000e+00> : vector<4x8x4xf32>
    %28 = tpu.matmul %24, %27, %cst_42 {dimension_numbers = #tpu.dot_dimension_numbers<[2], [0], [0, 1], [1], [0, 0, 0, 1, 1, 1], [], []>} : vector<4x8x4xf32>, vector<4x4xf32>, vector<4x8x4xf32> -> vector<4x8x4xf32>
    %29 = arith.addf %25, %28 : vector<4x8x4xf32>
    %c0_43 = arith.constant 0 : index
    %c0_44 = arith.constant 0 : index
    %c0_45 = arith.constant 0 : index
    %30 = vector.load %arg7[%c0_43, %c0_44, %c0_45] : memref<4x8x4xf32, #tpu.memory_space<vmem>>, vector<4x8x4xf32>
    tpu.vector_store %arg7[%c0_43, %c0_44, %c0_45], %29 {strides = array<i32>} : memref<4x8x4xf32, #tpu.memory_space<vmem>>, vector<4x8x4xf32>,
    %c0_46 = arith.constant 0 : index
    %c0_47 = arith.constant 0 : index
    %c1_48 = arith.constant 1 : index
    %c0_49 = arith.constant 0 : index
    %31 = tpu.strided_load %arg2[%c0_46, %c0_47, %c1_48, %c0_49] {strides = array<i32: 1, 2, 2, 1>} : memref<1x8x18x4xf32, #tpu.memory_space<vmem>>, vector<1x4x8x4xf32>
    %32 = vector.shape_cast %31 : vector<1x4x8x4xf32> to vector<4x8x4xf32>
    %c0_50 = arith.constant 0 : index
    %c0_51 = arith.constant 0 : index
    %c0_52 = arith.constant 0 : index
    %33 = vector.load %arg7[%c0_50, %c0_51, %c0_52] : memref<4x8x4xf32, #tpu.memory_space<vmem>>, vector<4x8x4xf32>
    %c0_53 = arith.constant 0 : index
    %c1_54 = arith.constant 1 : index
    %c0_55 = arith.constant 0 : index
    %c0_56 = arith.constant 0 : index
    %34 = vector.load %arg4[%c0_53, %c1_54, %c0_55, %c0_56] : memref<3x3x4x4xf32, #tpu.memory_space<vmem>>, vector<1x1x4x4xf32>
    %35 = vector.shape_cast %34 : vector<1x1x4x4xf32> to vector<4x4xf32>
    %cst_57 = arith.constant dense<0.000000e+00> : vector<4x8x4xf32>
    %36 = tpu.matmul %32, %35, %cst_57 {dimension_numbers = #tpu.dot_dimension_numbers<[2], [0], [0, 1], [1], [0, 0, 0, 1, 1, 1], [], []>} : vector<4x8x4xf32>, vector<4x4xf32>, vector<4x8x4xf32> -> vector<4x8x4xf32>
    %37 = arith.addf %33, %36 : vector<4x8x4xf32>
    %c0_58 = arith.constant 0 : index
    %c0_59 = arith.constant 0 : index
    %c0_60 = arith.constant 0 : index
    %38 = vector.load %arg7[%c0_58, %c0_59, %c0_60] : memref<4x8x4xf32, #tpu.memory_space<vmem>>, vector<4x8x4xf32>
    tpu.vector_store %arg7[%c0_58, %c0_59, %c0_60], %37 {strides = array<i32>} : memref<4x8x4xf32, #tpu.memory_space<vmem>>, vector<4x8x4xf32>,
    %c0_61 = arith.constant 0 : index
    %c0_62 = arith.constant 0 : index
    %c1_63 = arith.constant 1 : index
    %c0_64 = arith.constant 0 : index
    %39 = tpu.strided_load %arg3[%c0_61, %c0_62, %c1_63, %c0_64] {strides = array<i32: 1, 1, 2, 1>} : memref<1x1x18x4xf32, #tpu.memory_space<vmem>>, vector<1x1x8x4xf32>
    %40 = vector.shape_cast %39 : vector<1x1x8x4xf32> to vector<8x4xf32>
    %41 = vector.shape_cast %40 : vector<8x4xf32> to vector<1x8x4xf32>
    %42 = vector.extract_strided_slice %32 {offsets = [1, 0, 0], sizes = [3, 8, 4], strides = [1, 1, 1]} : vector<4x8x4xf32> to vector<3x8x4xf32>
    %43 = tpu.concatenate %42, %41 in 0 : vector<3x8x4xf32>, vector<1x8x4xf32> -> vector<4x8x4xf32>
    %c0_65 = arith.constant 0 : index
    %c0_66 = arith.constant 0 : index
    %c0_67 = arith.constant 0 : index
    %44 = vector.load %arg7[%c0_65, %c0_66, %c0_67] : memref<4x8x4xf32, #tpu.memory_space<vmem>>, vector<4x8x4xf32>
    %c2_68 = arith.constant 2 : index
    %c1_69 = arith.constant 1 : index
    %c0_70 = arith.constant 0 : index
    %c0_71 = arith.constant 0 : index
    %45 = vector.load %arg4[%c2_68, %c1_69, %c0_70, %c0_71] : memref<3x3x4x4xf32, #tpu.memory_space<vmem>>, vector<1x1x4x4xf32>
    %46 = vector.shape_cast %45 : vector<1x1x4x4xf32> to vector<4x4xf32>
    %cst_72 = arith.constant dense<0.000000e+00> : vector<4x8x4xf32>
    %47 = tpu.matmul %43, %46, %cst_72 {dimension_numbers = #tpu.dot_dimension_numbers<[2], [0], [0, 1], [1], [0, 0, 0, 1, 1, 1], [], []>} : vector<4x8x4xf32>, vector<4x4xf32>, vector<4x8x4xf32> -> vector<4x8x4xf32>
    %48 = arith.addf %44, %47 : vector<4x8x4xf32>
    %c0_73 = arith.constant 0 : index
    %c0_74 = arith.constant 0 : index
    %c0_75 = arith.constant 0 : index
    %49 = vector.load %arg7[%c0_73, %c0_74, %c0_75] : memref<4x8x4xf32, #tpu.memory_space<vmem>>, vector<4x8x4xf32>
    tpu.vector_store %arg7[%c0_73, %c0_74, %c0_75], %48 {strides = array<i32>} : memref<4x8x4xf32, #tpu.memory_space<vmem>>, vector<4x8x4xf32>,
    %c0_76 = arith.constant 0 : index
    %c1_77 = arith.constant 1 : index
    %c1_78 = arith.constant 1 : index
    %c0_79 = arith.constant 0 : index
    %50 = tpu.strided_load %arg2[%c0_76, %c1_77, %c1_78, %c0_79] {strides = array<i32: 1, 2, 2, 1>} : memref<1x8x18x4xf32, #tpu.memory_space<vmem>>, vector<1x4x8x4xf32>
    %51 = vector.shape_cast %50 : vector<1x4x8x4xf32> to vector<4x8x4xf32>
    %c0_80 = arith.constant 0 : index
    %c0_81 = arith.constant 0 : index
    %c0_82 = arith.constant 0 : index
    %52 = vector.load %arg7[%c0_80, %c0_81, %c0_82] : memref<4x8x4xf32, #tpu.memory_space<vmem>>, vector<4x8x4xf32>
    %c1_83 = arith.constant 1 : index
    %c1_84 = arith.constant 1 : index
    %c0_85 = arith.constant 0 : index
    %c0_86 = arith.constant 0 : index
    %53 = vector.load %arg4[%c1_83, %c1_84, %c0_85, %c0_86] : memref<3x3x4x4xf32, #tpu.memory_space<vmem>>, vector<1x1x4x4xf32>
    %54 = vector.shape_cast %53 : vector<1x1x4x4xf32> to vector<4x4xf32>
    %cst_87 = arith.constant dense<0.000000e+00> : vector<4x8x4xf32>
    %55 = tpu.matmul %51, %54, %cst_87 {dimension_numbers = #tpu.dot_dimension_numbers<[2], [0], [0, 1], [1], [0, 0, 0, 1, 1, 1], [], []>} : vector<4x8x4xf32>, vector<4x4xf32>, vector<4x8x4xf32> -> vector<4x8x4xf32>
    %56 = arith.addf %52, %55 : vector<4x8x4xf32>
    %c0_88 = arith.constant 0 : index
    %c0_89 = arith.constant 0 : index
    %c0_90 = arith.constant 0 : index
    %57 = vector.load %arg7[%c0_88, %c0_89, %c0_90] : memref<4x8x4xf32, #tpu.memory_space<vmem>>, vector<4x8x4xf32>
    tpu.vector_store %arg7[%c0_88, %c0_89, %c0_90], %56 {strides = array<i32>} : memref<4x8x4xf32, #tpu.memory_space<vmem>>, vector<4x8x4xf32>,
    %c0_91 = arith.constant 0 : index
    %c0_92 = arith.constant 0 : index
    %c2_93 = arith.constant 2 : index
    %c0_94 = arith.constant 0 : index
    %58 = tpu.strided_load %arg2[%c0_91, %c0_92, %c2_93, %c0_94] {strides = array<i32: 1, 2, 2, 1>} : memref<1x8x18x4xf32, #tpu.memory_space<vmem>>, vector<1x4x8x4xf32>
    %59 = vector.shape_cast %58 : vector<1x4x8x4xf32> to vector<4x8x4xf32>
    %c0_95 = arith.constant 0 : index
    %c0_96 = arith.constant 0 : index
    %c0_97 = arith.constant 0 : index
    %60 = vector.load %arg7[%c0_95, %c0_96, %c0_97] : memref<4x8x4xf32, #tpu.memory_space<vmem>>, vector<4x8x4xf32>
    %c0_98 = arith.constant 0 : index
    %c2_99 = arith.constant 2 : index
    %c0_100 = arith.constant 0 : index
    %c0_101 = arith.constant 0 : index
    %61 = vector.load %arg4[%c0_98, %c2_99, %c0_100, %c0_101] : memref<3x3x4x4xf32, #tpu.memory_space<vmem>>, vector<1x1x4x4xf32>
    %62 = vector.shape_cast %61 : vector<1x1x4x4xf32> to vector<4x4xf32>
    %cst_102 = arith.constant dense<0.000000e+00> : vector<4x8x4xf32>
    %63 = tpu.matmul %59, %62, %cst_102 {dimension_numbers = #tpu.dot_dimension_numbers<[2], [0], [0, 1], [1], [0, 0, 0, 1, 1, 1], [], []>} : vector<4x8x4xf32>, vector<4x4xf32>, vector<4x8x4xf32> -> vector<4x8x4xf32>
    %64 = arith.addf %60, %63 : vector<4x8x4xf32>
    %c0_103 = arith.constant 0 : index
    %c0_104 = arith.constant 0 : index
    %c0_105 = arith.constant 0 : index
    %65 = vector.load %arg7[%c0_103, %c0_104, %c0_105] : memref<4x8x4xf32, #tpu.memory_space<vmem>>, vector<4x8x4xf32>
    tpu.vector_store %arg7[%c0_103, %c0_104, %c0_105], %64 {strides = array<i32>} : memref<4x8x4xf32, #tpu.memory_space<vmem>>, vector<4x8x4xf32>,
    %c0_106 = arith.constant 0 : index
    %c0_107 = arith.constant 0 : index
    %c2_108 = arith.constant 2 : index
    %c0_109 = arith.constant 0 : index
    %66 = tpu.strided_load %arg3[%c0_106, %c0_107, %c2_108, %c0_109] {strides = array<i32: 1, 1, 2, 1>} : memref<1x1x18x4xf32, #tpu.memory_space<vmem>>, vector<1x1x8x4xf32>
    %67 = vector.shape_cast %66 : vector<1x1x8x4xf32> to vector<8x4xf32>
    %68 = vector.shape_cast %67 : vector<8x4xf32> to vector<1x8x4xf32>
    %69 = vector.extract_strided_slice %59 {offsets = [1, 0, 0], sizes = [3, 8, 4], strides = [1, 1, 1]} : vector<4x8x4xf32> to vector<3x8x4xf32>
    %70 = tpu.concatenate %69, %68 in 0 : vector<3x8x4xf32>, vector<1x8x4xf32> -> vector<4x8x4xf32>
    %c0_110 = arith.constant 0 : index
    %c0_111 = arith.constant 0 : index
    %c0_112 = arith.constant 0 : index
    %71 = vector.load %arg7[%c0_110, %c0_111, %c0_112] : memref<4x8x4xf32, #tpu.memory_space<vmem>>, vector<4x8x4xf32>
    %c2_113 = arith.constant 2 : index
    %c2_114 = arith.constant 2 : index
    %c0_115 = arith.constant 0 : index
    %c0_116 = arith.constant 0 : index
    %72 = vector.load %arg4[%c2_113, %c2_114, %c0_115, %c0_116] : memref<3x3x4x4xf32, #tpu.memory_space<vmem>>, vector<1x1x4x4xf32>
    %73 = vector.shape_cast %72 : vector<1x1x4x4xf32> to vector<4x4xf32>
    %cst_117 = arith.constant dense<0.000000e+00> : vector<4x8x4xf32>
    %74 = tpu.matmul %70, %73, %cst_117 {dimension_numbers = #tpu.dot_dimension_numbers<[2], [0], [0, 1], [1], [0, 0, 0, 1, 1, 1], [], []>} : vector<4x8x4xf32>, vector<4x4xf32>, vector<4x8x4xf32> -> vector<4x8x4xf32>
    %75 = arith.addf %71, %74 : vector<4x8x4xf32>
    %c0_118 = arith.constant 0 : index
    %c0_119 = arith.constant 0 : index
    %c0_120 = arith.constant 0 : index
    %76 = vector.load %arg7[%c0_118, %c0_119, %c0_120] : memref<4x8x4xf32, #tpu.memory_space<vmem>>, vector<4x8x4xf32>
    tpu.vector_store %arg7[%c0_118, %c0_119, %c0_120], %75 {strides = array<i32>} : memref<4x8x4xf32, #tpu.memory_space<vmem>>, vector<4x8x4xf32>,
    %c0_121 = arith.constant 0 : index
    %c1_122 = arith.constant 1 : index
    %c2_123 = arith.constant 2 : index
    %c0_124 = arith.constant 0 : index
    %77 = tpu.strided_load %arg2[%c0_121, %c1_122, %c2_123, %c0_124] {strides = array<i32: 1, 2, 2, 1>} : memref<1x8x18x4xf32, #tpu.memory_space<vmem>>, vector<1x4x8x4xf32>
    %78 = vector.shape_cast %77 : vector<1x4x8x4xf32> to vector<4x8x4xf32>
    %c0_125 = arith.constant 0 : index
    %c0_126 = arith.constant 0 : index
    %c0_127 = arith.constant 0 : index
    %79 = vector.load %arg7[%c0_125, %c0_126, %c0_127] : memref<4x8x4xf32, #tpu.memory_space<vmem>>, vector<4x8x4xf32>
    %c1_128 = arith.constant 1 : index
    %c2_129 = arith.constant 2 : index
    %c0_130 = arith.constant 0 : index
    %c0_131 = arith.constant 0 : index
    %80 = vector.load %arg4[%c1_128, %c2_129, %c0_130, %c0_131] : memref<3x3x4x4xf32, #tpu.memory_space<vmem>>, vector<1x1x4x4xf32>
    %81 = vector.shape_cast %80 : vector<1x1x4x4xf32> to vector<4x4xf32>
    %cst_132 = arith.constant dense<0.000000e+00> : vector<4x8x4xf32>
    %82 = tpu.matmul %78, %81, %cst_132 {dimension_numbers = #tpu.dot_dimension_numbers<[2], [0], [0, 1], [1], [0, 0, 0, 1, 1, 1], [], []>} : vector<4x8x4xf32>, vector<4x4xf32>, vector<4x8x4xf32> -> vector<4x8x4xf32>
    %83 = arith.addf %79, %82 : vector<4x8x4xf32>
    %c0_133 = arith.constant 0 : index
    %c0_134 = arith.constant 0 : index
    %c0_135 = arith.constant 0 : index
    %84 = vector.load %arg7[%c0_133, %c0_134, %c0_135] : memref<4x8x4xf32, #tpu.memory_space<vmem>>, vector<4x8x4xf32>
    tpu.vector_store %arg7[%c0_133, %c0_134, %c0_135], %83 {strides = array<i32>} : memref<4x8x4xf32, #tpu.memory_space<vmem>>, vector<4x8x4xf32>,
    %c0_136 = arith.constant 0 : index
    %c0_137 = arith.constant 0 : index
    %c0_138 = arith.constant 0 : index
    %85 = vector.load %arg7[%c0_136, %c0_137, %c0_138] : memref<4x8x4xf32, #tpu.memory_space<vmem>>, vector<4x8x4xf32>
    %c0_139 = arith.constant 0 : index
    %c0_140 = arith.constant 0 : index
    %c0_141 = arith.constant 0 : index
    %c0_142 = arith.constant 0 : index
    %86 = vector.load %arg6[%c0_139, %c0_140, %c0_141, %c0_142] : memref<1x4x8x4xf32, #tpu.memory_space<vmem>>, vector<1x4x8x4xf32>
    %87 = vector.shape_cast %86 : vector<1x4x8x4xf32> to vector<4x8x4xf32>
    %88 = vector.shape_cast %85 : vector<4x8x4xf32> to vector<1x4x8x4xf32>
    tpu.vector_store %arg6[%c0_139, %c0_140, %c0_141, %c0_142], %88 {strides = array<i32>} : memref<1x4x8x4xf32, #tpu.memory_space<vmem>>, vector<1x4x8x4xf32>,
    return
  }
  func.func @transform_0(%arg0: i32, %arg1: i32) -> (i32, i32, i32, i32) {
    %c0_i32 = arith.constant 0 : i32
    %c0_i32_0 = arith.constant 0 : i32
    %c0_i32_1 = arith.constant 0 : i32
    return %arg0, %arg1, %c0_i32, %c0_i32_0 : i32, i32, i32, i32
  }
  func.func @transform_1(%arg0: i32, %arg1: i32) -> (i32, i32, i32, i32) {
    %c0_i32 = arith.constant 0 : i32
    %c0_i32_0 = arith.constant 0 : i32
    %c0_i32_1 = arith.constant 0 : i32
    return %arg0, %arg1, %c0_i32, %c0_i32_0 : i32, i32, i32, i32
  }
  func.func @transform_2(%arg0: i32, %arg1: i32) -> (i32, i32, i32, i32) {
    %c0_i32 = arith.constant 0 : i32
    %c0_i32_0 = arith.constant 0 : i32
    %c0_i32_1 = arith.constant 0 : i32
    %c0_i32_2 = arith.constant 0 : i32
    %c0_i32_3 = arith.constant 0 : i32
    return %c0_i32, %c0_i32_0, %c0_i32_1, %c0_i32_2 : i32, i32, i32, i32
  }
  func.func @transform_3(%arg0: i32, %arg1: i32) -> (i32, i32) {
    %c0_i32 = arith.constant 0 : i32
    %c0_i32_0 = arith.constant 0 : i32
    %c0_i32_1 = arith.constant 0 : i32
    return %c0_i32, %c0_i32_0 : i32, i32
  }
  func.func @transform_4(%arg0: i32, %arg1: i32) -> (i32, i32, i32, i32) {
    %c0_i32 = arith.constant 0 : i32
    %c0_i32_0 = arith.constant 0 : i32
    %c0_i32_1 = arith.constant 0 : i32
    return %arg0, %arg1, %c0_i32, %c0_i32_0 : i32, i32, i32, i32
  }
}

</mosaic_0001>

<llo_original>
// kernel: tpu_custom_call.1
$region0: #{tpu_custom_call.1}
  #allocation0 [shape = 'u32[]', space=smem, size = 0x4, offset = 0x4, fixed_abs, tag = 'smem constant byte address 0x4 - core index']
  #allocation1 [shape = 'u32[144,128]{1,0:T(1,128)}', space=vmem, size = 0x12000, scoped, tag = 'internal scratch']
  #allocation2 [shape = 'f32[4,8,4]{2,1,0:T(8,128)}', space=vmem, size = 0x4000, scoped, tag = 'scratch operand']
  %s0 = inlined_call_operand.vmem [shape: f32[2,18,18,4], index: 0, kind: input, shape index: {}]
  %s1 = inlined_call_operand.vmem [shape: f32[2,2,18,4], index: 1, kind: input, shape index: {}]
  %s2 = inlined_call_operand.vmem [shape: f32[3,3,4,4], index: 2, kind: input, shape index: {}]
  %s3 = inlined_call_operand.vmem [shape: f32[1,4], index: 3, kind: input, shape index: {}]
  %s4 = inlined_call_operand.vmem [shape: f32[2,8,8,4], index: 4, kind: output, shape index: {}]
  %s5 = sld [smem:[#allocation0]]
  $region49: #{tpu_custom_call.1} parent=0
    _
  %s7 = ssub.s32 1, %s5
  %s8 = scalar_select 0, %s7, %s5
  loop: start=0, step=1, limit=6
  $region2: #{tpu_custom_call.1} parent=0 // loop_pre_header
    _
  $region3: #{tpu_custom_call.1} parent=0 // loop_header
    %s10 = sphi 0, %s14
    %p11 = scmp.ge.s32.totalorder %s10, 6
    %s17 = sphi 0, %s29
    %s18 = sphi 0, %s25
    %s19 = sphi 0, %s17
    %s20 = sphi 0, %s18
    %s21 = sphi 0, %s19
    %s22 = sphi 0, %s20
    %s34 = sphi 0, %s36
    %s37 = sphi 0, %s34
    %s38 = sphi 0, %s37
    %s54 = sphi 0, %s38
    %s62 = sphi 0, %s64
    %s65 = sphi 0, %s62
    %s66 = sphi 0, %s65
    %s82 = sphi 0, %s66
    %s86 = sphi 0, %s86
    %s88 = sphi 0, %s86
    %s89 = sphi 0, %s88
    %s103 = sphi 0, %s89
    %s107 = sphi 0, %s107
    %s109 = sphi 0, %s107
    %s110 = sphi 0, %s109
    %s124 = sphi 0, %s110
    %s132 = sphi 0, %s134
    %s135 = sphi 0, %s132
    %s136 = sphi 0, %s135
    %s152 = sphi 0, %s136
  $region4: #{tpu_custom_call.1} parent=0 // loop_header_branch
    %13 = sbr.rel (%p11) target = $region8
  $region5: #{tpu_custom_call.1} parent=0 // loop_body
    %s15 = ssub.s32 %s10, 1
    %s16 = ssub.s32 %s10, 2
    %s23 = sadd.s32 1, %s18
    %p24 = scmp.ge.s32.totalorder %s23, 2
    %s25 = scalar_select %p24, 0, %s23
    %s26 = sadd.s32 1, %s17
    %s27 = scalar_select %p24, %s26, %s17
    %p28 = scmp.ge.s32.totalorder %s27, 2
    %s29 = scalar_select %p28, 0, %s27
    %s30 = ssub.s32 %s17, %s29
    %s31 = ssub.s32 %s18, %s25
    %s32 = sor.u32 %s30, %s31
    %p33 = scmp.eq.s32.totalorder %s32, 0
    %s35 = sadd.s32 %s34, 1
    %s36 = scalar_select %p33, %s34, %s35
    %p39 = pneg %p33
    %p40 = scmp.eq.s32.totalorder %s10, 3
    %p41 = por %p39, %p40
    %p42 = scmp.ne.s32.totalorder %s34, %s37
    %p43 = scmp.eq.s32.totalorder %s10, 0
    %p44 = por %p42, %p43
    %p45 = scmp.ne.s32.totalorder %s34, %s37
    %p46 = scmp.eq.s32.totalorder %s15, 3
    %p47 = por %p45, %p46
    %p48 = scmp.ne.s32.totalorder %s37, %s38
    %p49 = scmp.eq.s32.totalorder %s15, 0
    %p50 = por %p48, %p49
    %p51 = scmp.ne.s32.totalorder %s37, %s38
    %p52 = scmp.eq.s32.totalorder %s16, 3
    %p53 = por %p51, %p52
    %p55 = scmp.ne.s32.totalorder %s38, %s54
    %p56 = scmp.eq.s32.totalorder %s16, 0
    %p57 = por %p55, %p56
    %s58 = ssub.s32 %s17, %s29
    %s59 = ssub.s32 %s18, %s25
    %s60 = sor.u32 %s58, %s59
    %p61 = scmp.eq.s32.totalorder %s60, 0
    %s63 = sadd.s32 %s62, 1
    %s64 = scalar_select %p61, %s62, %s63
    %p67 = pneg %p61
    %p68 = scmp.eq.s32.totalorder %s10, 3
    %p69 = por %p67, %p68
    %p70 = scmp.ne.s32.totalorder %s62, %s65
    %p71 = scmp.eq.s32.totalorder %s10, 0
    %p72 = por %p70, %p71
    %p73 = scmp.ne.s32.totalorder %s62, %s65
    %p74 = scmp.eq.s32.totalorder %s15, 3
    %p75 = por %p73, %p74
    %p76 = scmp.ne.s32.totalorder %s65, %s66
    %p77 = scmp.eq.s32.totalorder %s15, 0
    %p78 = por %p76, %p77
    %p79 = scmp.ne.s32.totalorder %s65, %s66
    %p80 = scmp.eq.s32.totalorder %s16, 3
    %p81 = por %p79, %p80
    %p83 = scmp.ne.s32.totalorder %s66, %s82
    %p84 = scmp.eq.s32.totalorder %s16, 0
    %p85 = por %p83, %p84
    %s87 = sadd.s32 %s86, 1
    %p90 = scmp.eq.s32.totalorder %s10, 3
    %p91 = scmp.ne.s32.totalorder %s86, %s88
    %p92 = scmp.eq.s32.totalorder %s10, 0
    %p93 = por %p91, %p92
    %p94 = scmp.ne.s32.totalorder %s86, %s88
    %p95 = scmp.eq.s32.totalorder %s15, 3
    %p96 = por %p94, %p95
    %p97 = scmp.ne.s32.totalorder %s88, %s89
    %p98 = scmp.eq.s32.totalorder %s15, 0
    %p99 = por %p97, %p98
    %p100 = scmp.ne.s32.totalorder %s88, %s89
    %p101 = scmp.eq.s32.totalorder %s16, 3
    %p102 = por %p100, %p101
    %p104 = scmp.ne.s32.totalorder %s89, %s103
    %p105 = scmp.eq.s32.totalorder %s16, 0
    %p106 = por %p104, %p105
    %s108 = sadd.s32 %s107, 1
    %p111 = scmp.eq.s32.totalorder %s10, 3
    %p112 = scmp.ne.s32.totalorder %s107, %s109
    %p113 = scmp.eq.s32.totalorder %s10, 0
    %p114 = por %p112, %p113
    %p115 = scmp.ne.s32.totalorder %s107, %s109
    %p116 = scmp.eq.s32.totalorder %s15, 3
    %p117 = por %p115, %p116
    %p118 = scmp.ne.s32.totalorder %s109, %s110
    %p119 = scmp.eq.s32.totalorder %s15, 0
    %p120 = por %p118, %p119
    %p121 = scmp.ne.s32.totalorder %s109, %s110
    %p122 = scmp.eq.s32.totalorder %s16, 3
    %p123 = por %p121, %p122
    %p125 = scmp.ne.s32.totalorder %s110, %s124
    %p126 = scmp.eq.s32.totalorder %s16, 0
    %p127 = por %p125, %p126
    %s128 = ssub.s32 %s17, %s29
    %s129 = ssub.s32 %s18, %s25
    %s130 = sor.u32 %s128, %s129
    %p131 = scmp.eq.s32.totalorder %s130, 0
    %s133 = sadd.s32 %s132, 1
    %s134 = scalar_select %p131, %s132, %s133
    %p137 = pneg %p131
    %p138 = scmp.eq.s32.totalorder %s10, 3
    %p139 = por %p137, %p138
    %p140 = scmp.ne.s32.totalorder %s132, %s135
    %p141 = scmp.eq.s32.totalorder %s10, 0
    %p142 = por %p140, %p141
    %p143 = scmp.ne.s32.totalorder %s132, %s135
    %p144 = scmp.eq.s32.totalorder %s15, 3
    %p145 = por %p143, %p144
    %p146 = scmp.ne.s32.totalorder %s135, %s136
    %p147 = scmp.eq.s32.totalorder %s15, 0
    %p148 = por %p146, %p147
    %p149 = scmp.ne.s32.totalorder %s135, %s136
    %p150 = scmp.eq.s32.totalorder %s16, 3
    %p151 = por %p149, %p150
    %p153 = scmp.ne.s32.totalorder %s136, %s152
    %p154 = scmp.eq.s32.totalorder %s16, 0
    %p155 = por %p153, %p154
    %p156 = scmp.le.s32.totalorder 1, %s10
    %p157 = scmp.lt.s32.totalorder %s10, 5
    %p158 = pnand %p156, %p157
    %p159 = pneg %p158
    // Predicated region
    $region9: #{tpu_custom_call.1} parent=5 // pred_check
      _
    $region10: #{tpu_custom_call.1} parent=5 // pred_check_branch
      %161 = sbr.rel (%p158) target = $region12
    $region11: #{tpu_custom_call.1} parent=5 // pred_region
      %s162 = ssub.s32 %s10, 1
      // Predicated region
      $region13: #{tpu_custom_call.1} parent=11 // pred_check
        %p163 = pneg %p99
      $region14: #{tpu_custom_call.1} parent=11 // pred_check_branch
        %165 = sbr.rel (%p163) target = $region16
      $region15: #{tpu_custom_call.1} parent=11 // pred_region
        _
      $region16: #{tpu_custom_call.1} parent=11 // pred_fallthru
        _
      // Predicated region
      $region17: #{tpu_custom_call.1} parent=11 // pred_check
        %p166 = pneg %p120
      $region18: #{tpu_custom_call.1} parent=11 // pred_check_branch
        %168 = sbr.rel (%p166) target = $region20
      $region19: #{tpu_custom_call.1} parent=11 // pred_region
        _
      $region20: #{tpu_custom_call.1} parent=11 // pred_fallthru
        _
    $region12: #{tpu_custom_call.1} parent=5 // pred_fallthru
      _
    %p169 = scmp.lt.s32.totalorder %s10, 4
    // Predicated region
    $region21: #{tpu_custom_call.1} parent=5 // pred_check
      %p170 = pneg %p169
    $region22: #{tpu_custom_call.1} parent=5 // pred_check_branch
      %172 = sbr.rel (%p170) target = $region24
    $region23: #{tpu_custom_call.1} parent=5 // pred_region
      // Predicated region
      $region25: #{tpu_custom_call.1} parent=23 // pred_check
        %p173 = pneg %p44
      $region26: #{tpu_custom_call.1} parent=23 // pred_check_branch
        %175 = sbr.rel (%p173) target = $region28
      $region27: #{tpu_custom_call.1} parent=23 // pred_region
        %s176 = smul.u32 8, %s18
        %s177 = ssub.s32 18, %s176
        %p178 = scmp.lt.s32.totalorder %s177, 8
        %s179 = scalar_select %p178, %s177, 8
        %s180 = smul.u32 128, %s179
        %s181 = smul.u32 %s180, 3
        %p182 = scmp.lt.s32.totalorder %s17, 1
        %s183 = scalar_select %p182, %s17, 1
        %p184 = scmp.lt.s32.totalorder %s176, 17
        %s185 = scalar_select %p184, %s176, 17
        %s186 = smul.addr %s185, 3
        %s187 = smul.addr %s183, 54
        %s188 = sadd.s32 %s186, %s187
        %s189 = smul.addr %s188, 8
        %s190 = scalar_lea.vmem %s0, %s189
        %s191 = smul.u32 8, %s18
        %s192 = ssub.s32 18, %s191
        %p193 = scmp.lt.s32.totalorder %s192, 8
        %s194 = scalar_select %p193, %s192, 8
        %s195 = smul.u32 128, %s194
        %s196 = smul.u32 %s195, 3
      $region28: #{tpu_custom_call.1} parent=23 // pred_fallthru
        _
      // Predicated region
      $region29: #{tpu_custom_call.1} parent=23 // pred_check
        %p197 = pneg %p72
      $region30: #{tpu_custom_call.1} parent=23 // pred_check_branch
        %199 = sbr.rel (%p197) target = $region32
      $region31: #{tpu_custom_call.1} parent=23 // pred_region
        %p200 = scmp.lt.s32.totalorder %s17, 1
        %s201 = scalar_select %p200, %s17, 1
        %p202 = scmp.lt.s32.totalorder %s18, 1
        %s203 = scalar_select %p202, %s18, 1
        %s204 = smul.addr %s203, 3
        %s205 = smul.addr %s201, 6
        %s206 = sadd.s32 %s204, %s205
        %s207 = smul.addr %s206, 8
        %s208 = scalar_lea.vmem %s1, %s207
      $region32: #{tpu_custom_call.1} parent=23 // pred_fallthru
        _
    $region24: #{tpu_custom_call.1} parent=5 // pred_fallthru
      _
    %p209 = scmp.le.s32.totalorder 1, %s10
    %p210 = scmp.lt.s32.totalorder %s10, 5
    %p211 = pnand %p209, %p210
    %p212 = pneg %p211
    // Predicated region
    $region33: #{tpu_custom_call.1} parent=5 // pred_check
      _
    $region34: #{tpu_custom_call.1} parent=5 // pred_check_branch
      %214 = sbr.rel (%p211) target = $region36
    $region35: #{tpu_custom_call.1} parent=5 // pred_region
      %s215 = ssub.s32 %s10, 1
      %s216 = smul.u32 8, %s20
      %s217 = ssub.s32 18, %s216
      %p218 = scmp.lt.s32.totalorder %s217, 8
      %s219 = scalar_select %p218, %s217, 8
      %s220 = smul.u32 128, %s219
      %s221 = smul.u32 %s220, 3
      %p222 = scmp.lt.s32.totalorder %s19, 1
      %s223 = scalar_select %p222, %s19, 1
      %p224 = scmp.lt.s32.totalorder %s216, 17
      %s225 = scalar_select %p224, %s216, 17
      %s226 = smul.addr %s225, 3
      %s227 = smul.addr %s223, 54
      %s228 = sadd.s32 %s226, %s227
      %s229 = smul.addr %s228, 8
      %s230 = scalar_lea.vmem %s0, %s229
      %p231 = pneg %p50
      %p232 = pneg %p47
      %p233 = scmp.lt.s32.totalorder %s19, 1
      %s234 = scalar_select %p233, %s19, 1
      %p235 = scmp.lt.s32.totalorder %s20, 1
      %s236 = scalar_select %p235, %s20, 1
      %s237 = smul.addr %s236, 3
      %s238 = smul.addr %s234, 6
      %s239 = sadd.s32 %s237, %s238
      %s240 = smul.addr %s239, 8
      %s241 = scalar_lea.vmem %s1, %s240
      %p242 = pneg %p78
      %p243 = pneg %p75
      %p244 = pneg %p99
      %p245 = pneg %p96
      %p246 = pneg %p120
      %p247 = pneg %p117
      %p248 = pneg %p148
      %p249 = pneg %p145
      %s250 = smul.u32 4, %s20
      %p251 = scmp.lt.s32.totalorder %s19, 1
      %s252 = scalar_select %p251, %s19, 1
      %p253 = scmp.lt.s32.totalorder %s250, 7
      %s254 = scalar_select %p253, %s250, 7
      %s255 = smul.addr %s252, 8
      %s256 = sadd.s32 %s254, %s255
      %s257 = smul.addr %s256, 8
      %s258 = scalar_lea.vmem %s4, %s257
      %s259 = smul.u32 8, %s20
      %s260 = ssub.s32 18, %s259
      %p261 = scmp.lt.s32.totalorder %s260, 8
      %s262 = scalar_select %p261, %s260, 8
      %s263 = smul.u32 128, %s262
      %s264 = smul.u32 %s263, 3
      %p265 = scmp.lt.s32.totalorder %s19, 1
      %s266 = scalar_select %p265, %s19, 1
      %p267 = scmp.lt.s32.totalorder %s259, 17
      %s268 = scalar_select %p267, %s259, 17
      %s269 = smul.addr %s268, 3
      %s270 = smul.addr %s266, 54
      %s271 = sadd.s32 %s269, %s270
      %s272 = smul.addr %s271, 8
      %s273 = scalar_lea.vmem %s0, %s272
      %s274 = smul.u32 8, %s20
      %s275 = ssub.s32 18, %s274
      %p276 = scmp.lt.s32.totalorder %s275, 8
      %s277 = scalar_select %p276, %s275, 8
      %s278 = smul.u32 128, %s277
      %s279 = smul.u32 %s278, 3
      %p280 = scmp.lt.s32.totalorder %s19, 1
      %s281 = scalar_select %p280, %s19, 1
      %p282 = scmp.lt.s32.totalorder %s20, 1
      %s283 = scalar_select %p282, %s20, 1
      %s284 = smul.addr %s283, 3
      %s285 = smul.addr %s281, 6
      %s286 = sadd.s32 %s284, %s285
      %s287 = smul.addr %s286, 8
      %s288 = scalar_lea.vmem %s1, %s287
      %s289 = smul.u32 4, %s20
      %p290 = scmp.lt.s32.totalorder %s19, 1
      %s291 = scalar_select %p290, %s19, 1
      %p292 = scmp.lt.s32.totalorder %s289, 7
      %s293 = scalar_select %p292, %s289, 7
      %s294 = smul.addr %s291, 8
      %s295 = sadd.s32 %s293, %s294
      %s296 = smul.addr %s295, 8
      %s297 = scalar_lea.vmem %s4, %s296
      %s298 = smul.u32 4, %s20
      %v299 = vld [vmem:[%s3] sm:$0x1]
      %v301 = vlaneseq
      %v302 = vshrl.u32 %v301, 7
      %v303 = vsub.s32 0, %v302
      %v304 = vrot.slane %v299, %v303
      %vm306 = vcmask 31744
      %307 = vst.msk [vmem:[#allocation2] sm:$0xff] %vm306, %v304
      %308 = vst.msk [vmem:[#allocation2 + $0x8] sm:$0xff] %vm306, %v304
      %309 = vst.msk [vmem:[#allocation2 + $0x10] sm:$0xff] %vm306, %v304
      %310 = vst.msk [vmem:[#allocation2 + $0x18] sm:$0xff] %vm306, %v304
      %v311 = vld [vmem:[%s273] ss:$2 sm:$0xff]
      %s312 = scalar_lea.vmem %s273, 48
      %v313 = vld [vmem:[%s312] ss:$2 sm:$0xff]
      %s314 = scalar_lea.vmem %s273, 96
      %v315 = vld [vmem:[%s314] ss:$2 sm:$0xff]
      %s316 = scalar_lea.vmem %s273, 144
      %v317 = vld [vmem:[%s316] ss:$2 sm:$0xff]
      %v318 = vld [vmem:[#allocation2] sm:$0xff]
      %v319 = vld [vmem:[#allocation2 + $0x8] sm:$0xff]
      %v320 = vld [vmem:[#allocation2 + $0x10] sm:$0xff]
      %v321 = vld [vmem:[#allocation2 + $0x18] sm:$0xff]
      %v322 = vld [vmem:[%s2] sm:$0xf]
      %v324 = vsel %vm306, %v311, 0
      %v327 = vsel %vm306, %v313, 0
      %v330 = vsel %vm306, %v315, 0
      %v333 = vsel %vm306, %v317, 0
      %vm335 = vcmask 1043456
      %v337 = vsel %vm335, %v322, 0
      %339 = vmatprep.subr.mxu0 0.0
      %340 = vmatpush1.msra.mxu0 %v337
      %341 = vmatprep.subr.mxu0 0.0
      %342 = vmatpush1.msra.mxu0 0.0
      %343 = vmatprep.subr.mxu0 0.0
      %344 = vmatpush1.msra.mxu0 0.0
      %345 = vmatprep.subr.mxu0 0.0
      %346 = vmatpush1.msra.mxu0 0.0
      %347 = vmatprep.subr.mxu0 0.0
      %348 = vmatpush1.msra.mxu0 0.0
      %349 = vmatprep.subr.mxu0 0.0
      %350 = vmatpush1.msra.mxu0 0.0
      %351 = vmatprep.subr.mxu0 0.0
      %352 = vmatpush1.msra.mxu0 0.0
      %353 = vmatprep.subr.mxu0 0.0
      %354 = vmatpush1.msra.mxu0 0.0
      %355 = vmatprep.subr.mxu0 0.0
      %356 = vmatpush1.msra.mxu0 0.0
      %357 = vmatprep.subr.mxu0 0.0
      %358 = vmatpush1.msra.mxu0 0.0
      %359 = vmatprep.subr.mxu0 0.0
      %360 = vmatpush1.msra.mxu0 0.0
      %361 = vmatprep.subr.mxu0 0.0
      %362 = vmatpush1.msra.mxu0 0.0
      %363 = vmatprep.subr.mxu0 0.0
      %364 = vmatpush1.msra.mxu0 0.0
      %365 = vmatprep.subr.mxu0 0.0
      %366 = vmatpush1.msra.mxu0 0.0
      %367 = vmatprep.subr.mxu0 0.0
      %368 = vmatpush1.msra.mxu0 0.0
      %369 = vmatprep.subr.mxu0 0.0
      %370 = vmatpush1.msra.mxu0 0.0
      %371 = vmatprep.subr.mxu0 0.0
      %372 = vmatpush1.msra.mxu0 0.0
      %373 = vmatprep.subr.mxu0 0.0
      %374 = vmatpush1.msra.mxu0 0.0
      %375 = vmatprep.subr.mxu0 0.0
      %376 = vmatpush1.msra.mxu0 0.0
      %377 = vmatprep.subr.mxu0 0.0
      %378 = vmatpush1.msra.mxu0 0.0
      %379 = vmatprep.subr.mxu0 0.0
      %380 = vmatpush1.msra.mxu0 0.0
      %381 = vmatprep.subr.mxu0 0.0
      %382 = vmatpush1.msra.mxu0 0.0
      %383 = vmatprep.subr.mxu0 0.0
      %384 = vmatpush1.msra.mxu0 0.0
      %385 = vmatprep.subr.mxu0 0.0
      %386 = vmatpush1.msra.mxu0 0.0
      %387 = vmatprep.subr.mxu0 0.0
      %388 = vmatpush1.msra.mxu0 0.0
      %389 = vmatprep.subr.mxu0 0.0
      %390 = vmatpush1.msra.mxu0 0.0
      %391 = vmatprep.subr.mxu0 0.0
      %392 = vmatpush1.msra.mxu0 0.0
      %393 = vmatprep.subr.mxu0 0.0
      %394 = vmatpush1.msra.mxu0 0.0
      %395 = vmatprep.subr.mxu0 0.0
      %396 = vmatpush1.msra.mxu0 0.0
      %397 = vmatprep.subr.mxu0 0.0
      %398 = vmatpush1.msra.mxu0 0.0
      %399 = vmatprep.subr.mxu0 0.0
      %400 = vmatpush1.msra.mxu0 0.0
      %401 = vmatprep.subr.mxu0 0.0
      %402 = vmatpush1.msra.mxu0 0.0
      %403 = vmatprep.mubr.f32.mxu0 0.0
      %404 = vmatmul.mubr.f32.gmra.mrb[0].mxu0 %v324
      %v405 = vpop.f32.mrb[0].mxu0
      %v406 = vadd.f32 0.0, %v405
      %v407 = vpop.f32.mrb[0].mxu0
      %408 = vmatprep.mubr.f32.mxu0 0.0
      %409 = vmatmul.mubr.f32.gmra.mrb[0].mxu0 %v327
      %v410 = vpop.f32.mrb[0].mxu0
      %v411 = vadd.f32 0.0, %v410
      %v412 = vpop.f32.mrb[0].mxu0
      %413 = vmatprep.mubr.f32.mxu0 0.0
      %414 = vmatmul.mubr.f32.gmra.mrb[0].mxu0 %v330
      %v415 = vpop.f32.mrb[0].mxu0
      %v416 = vadd.f32 0.0, %v415
      %v417 = vpop.f32.mrb[0].mxu0
      %418 = vmatprep.mubr.f32.mxu0 0.0
      %419 = vmatmul.mubr.f32.gmra.mrb[0].mxu0 %v333
      %v420 = vpop.f32.mrb[0].mxu0
      %v421 = vadd.f32 0.0, %v420
      %v422 = vpop.f32.mrb[0].mxu0
      %423 = vdwg.mxu0
      %v424 = vadd.f32 %v318, %v406
      %v425 = vadd.f32 %v319, %v411
      %v426 = vadd.f32 %v320, %v416
      %v427 = vadd.f32 %v321, %v421
      %428 = vst.msk [vmem:[#allocation2] sm:$0xff] %vm306, %v424
      %429 = vst.msk [vmem:[#allocation2 + $0x8] sm:$0xff] %vm306, %v425
      %430 = vst.msk [vmem:[#allocation2 + $0x10] sm:$0xff] %vm306, %v426
      %431 = vst.msk [vmem:[#allocation2 + $0x18] sm:$0xff] %vm306, %v427
      %v432 = vld [vmem:[%s288] ss:$2 sm:$0xff]
      %v433 = vld [vmem:[#allocation2] sm:$0xff]
      %v434 = vld [vmem:[#allocation2 + $0x8] sm:$0xff]
      %v435 = vld [vmem:[#allocation2 + $0x10] sm:$0xff]
      %v436 = vld [vmem:[#allocation2 + $0x18] sm:$0xff]
      %s437 = scalar_lea.vmem %s2, 24
      %v438 = vld [vmem:[%s437] sm:$0xf]
      %v440 = vsel %vm306, %v432, 0
      %v443 = vsel %vm335, %v438, 0
      %445 = vmatprep.subr.mxu0 0.0
      %446 = vmatpush1.msra.mxu0 %v443
      %447 = vmatprep.subr.mxu0 0.0
      %448 = vmatpush1.msra.mxu0 0.0
      %449 = vmatprep.subr.mxu0 0.0
      %450 = vmatpush1.msra.mxu0 0.0
      %451 = vmatprep.subr.mxu0 0.0
      %452 = vmatpush1.msra.mxu0 0.0
      %453 = vmatprep.subr.mxu0 0.0
      %454 = vmatpush1.msra.mxu0 0.0
      %455 = vmatprep.subr.mxu0 0.0
      %456 = vmatpush1.msra.mxu0 0.0
      %457 = vmatprep.subr.mxu0 0.0
      %458 = vmatpush1.msra.mxu0 0.0
      %459 = vmatprep.subr.mxu0 0.0
      %460 = vmatpush1.msra.mxu0 0.0
      %461 = vmatprep.subr.mxu0 0.0
      %462 = vmatpush1.msra.mxu0 0.0
      %463 = vmatprep.subr.mxu0 0.0
      %464 = vmatpush1.msra.mxu0 0.0
      %465 = vmatprep.subr.mxu0 0.0
      %466 = vmatpush1.msra.mxu0 0.0
      %467 = vmatprep.subr.mxu0 0.0
      %468 = vmatpush1.msra.mxu0 0.0
      %469 = vmatprep.subr.mxu0 0.0
      %470 = vmatpush1.msra.mxu0 0.0
      %471 = vmatprep.subr.mxu0 0.0
      %472 = vmatpush1.msra.mxu0 0.0
      %473 = vmatprep.subr.mxu0 0.0
      %474 = vmatpush1.msra.mxu0 0.0
      %475 = vmatprep.subr.mxu0 0.0
      %476 = vmatpush1.msra.mxu0 0.0
      %477 = vmatprep.subr.mxu0 0.0
      %478 = vmatpush1.msra.mxu0 0.0
      %479 = vmatprep.subr.mxu0 0.0
      %480 = vmatpush1.msra.mxu0 0.0
      %481 = vmatprep.subr.mxu0 0.0
      %482 = vmatpush1.msra.mxu0 0.0
      %483 = vmatprep.subr.mxu0 0.0
      %484 = vmatpush1.msra.mxu0 0.0
      %485 = vmatprep.subr.mxu0 0.0
      %486 = vmatpush1.msra.mxu0 0.0
      %487 = vmatprep.subr.mxu0 0.0
      %488 = vmatpush1.msra.mxu0 0.0
      %489 = vmatprep.subr.mxu0 0.0
      %490 = vmatpush1.msra.mxu0 0.0
      %491 = vmatprep.subr.mxu0 0.0
      %492 = vmatpush1.msra.mxu0 0.0
      %493 = vmatprep.subr.mxu0 0.0
      %494 = vmatpush1.msra.mxu0 0.0
      %495 = vmatprep.subr.mxu0 0.0
      %496 = vmatpush1.msra.mxu0 0.0
      %497 = vmatprep.subr.mxu0 0.0
      %498 = vmatpush1.msra.mxu0 0.0
      %499 = vmatprep.subr.mxu0 0.0
      %500 = vmatpush1.msra.mxu0 0.0
      %501 = vmatprep.subr.mxu0 0.0
      %502 = vmatpush1.msra.mxu0 0.0
      %503 = vmatprep.subr.mxu0 0.0
      %504 = vmatpush1.msra.mxu0 0.0
      %505 = vmatprep.subr.mxu0 0.0
      %506 = vmatpush1.msra.mxu0 0.0
      %507 = vmatprep.subr.mxu0 0.0
      %508 = vmatpush1.msra.mxu0 0.0
      %509 = vmatprep.mubr.f32.mxu0 0.0
      %510 = vmatmul.mubr.f32.gmra.mrb[0].mxu0 %v327
      %v511 = vpop.f32.mrb[0].mxu0
      %v512 = vadd.f32 0.0, %v511
      %v513 = vpop.f32.mrb[0].mxu0
      %514 = vmatprep.mubr.f32.mxu0 0.0
      %515 = vmatmul.mubr.f32.gmra.mrb[0].mxu0 %v330
      %v516 = vpop.f32.mrb[0].mxu0
      %v517 = vadd.f32 0.0, %v516
      %v518 = vpop.f32.mrb[0].mxu0
      %519 = vmatprep.mubr.f32.mxu0 0.0
      %520 = vmatmul.mubr.f32.gmra.mrb[0].mxu0 %v333
      %v521 = vpop.f32.mrb[0].mxu0
      %v522 = vadd.f32 0.0, %v521
      %v523 = vpop.f32.mrb[0].mxu0
      %524 = vmatprep.mubr.f32.mxu0 0.0
      %525 = vmatmul.mubr.f32.gmra.mrb[0].mxu0 %v440
      %v526 = vpop.f32.mrb[0].mxu0
      %v527 = vadd.f32 0.0, %v526
      %v528 = vpop.f32.mrb[0].mxu0
      %529 = vdwg.mxu0
      %v530 = vadd.f32 %v433, %v512
      %v531 = vadd.f32 %v434, %v517
      %v532 = vadd.f32 %v435, %v522
      %v533 = vadd.f32 %v436, %v527
      %534 = vst.msk [vmem:[#allocation2] sm:$0xff] %vm306, %v530
      %535 = vst.msk [vmem:[#allocation2 + $0x8] sm:$0xff] %vm306, %v531
      %536 = vst.msk [vmem:[#allocation2 + $0x10] sm:$0xff] %vm306, %v532
      %537 = vst.msk [vmem:[#allocation2 + $0x18] sm:$0xff] %vm306, %v533
      %s538 = scalar_lea.vmem %s273, 24
      %v539 = vld [vmem:[%s538] ss:$2 sm:$0xff]
      %s540 = scalar_lea.vmem %s538, 48
      %v541 = vld [vmem:[%s540] ss:$2 sm:$0xff]
      %s542 = scalar_lea.vmem %s538, 96
      %v543 = vld [vmem:[%s542] ss:$2 sm:$0xff]
      %s544 = scalar_lea.vmem %s538, 144
      %v545 = vld [vmem:[%s544] ss:$2 sm:$0xff]
      %v546 = vld [vmem:[#allocation2] sm:$0xff]
      %v547 = vld [vmem:[#allocation2 + $0x8] sm:$0xff]
      %v548 = vld [vmem:[#allocation2 + $0x10] sm:$0xff]
      %v549 = vld [vmem:[#allocation2 + $0x18] sm:$0xff]
      %s550 = scalar_lea.vmem %s2, 12
      %v551 = vld [vmem:[%s550] sm:$0xf]
      %v553 = vsel %vm306, %v539, 0
      %v556 = vsel %vm306, %v541, 0
      %v559 = vsel %vm306, %v543, 0
      %v562 = vsel %vm306, %v545, 0
      %v565 = vsel %vm335, %v551, 0
      %567 = vmatprep.subr.mxu0 0.0
      %568 = vmatpush1.msra.mxu0 %v565
      %569 = vmatprep.subr.mxu0 0.0
      %570 = vmatpush1.msra.mxu0 0.0
      %571 = vmatprep.subr.mxu0 0.0
      %572 = vmatpush1.msra.mxu0 0.0
      %573 = vmatprep.subr.mxu0 0.0
      %574 = vmatpush1.msra.mxu0 0.0
      %575 = vmatprep.subr.mxu0 0.0
      %576 = vmatpush1.msra.mxu0 0.0
      %577 = vmatprep.subr.mxu0 0.0
      %578 = vmatpush1.msra.mxu0 0.0
      %579 = vmatprep.subr.mxu0 0.0
      %580 = vmatpush1.msra.mxu0 0.0
      %581 = vmatprep.subr.mxu0 0.0
      %582 = vmatpush1.msra.mxu0 0.0
      %583 = vmatprep.subr.mxu0 0.0
      %584 = vmatpush1.msra.mxu0 0.0
      %585 = vmatprep.subr.mxu0 0.0
      %586 = vmatpush1.msra.mxu0 0.0
      %587 = vmatprep.subr.mxu0 0.0
      %588 = vmatpush1.msra.mxu0 0.0
      %589 = vmatprep.subr.mxu0 0.0
      %590 = vmatpush1.msra.mxu0 0.0
      %591 = vmatprep.subr.mxu0 0.0
      %592 = vmatpush1.msra.mxu0 0.0
      %593 = vmatprep.subr.mxu0 0.0
      %594 = vmatpush1.msra.mxu0 0.0
      %595 = vmatprep.subr.mxu0 0.0
      %596 = vmatpush1.msra.mxu0 0.0
      %597 = vmatprep.subr.mxu0 0.0
      %598 = vmatpush1.msra.mxu0 0.0
      %599 = vmatprep.subr.mxu0 0.0
      %600 = vmatpush1.msra.mxu0 0.0
      %601 = vmatprep.subr.mxu0 0.0
      %602 = vmatpush1.msra.mxu0 0.0
      %603 = vmatprep.subr.mxu0 0.0
      %604 = vmatpush1.msra.mxu0 0.0
      %605 = vmatprep.subr.mxu0 0.0
      %606 = vmatpush1.msra.mxu0 0.0
      %607 = vmatprep.subr.mxu0 0.0
      %608 = vmatpush1.msra.mxu0 0.0
      %609 = vmatprep.subr.mxu0 0.0
      %610 = vmatpush1.msra.mxu0 0.0
      %611 = vmatprep.subr.mxu0 0.0
      %612 = vmatpush1.msra.mxu0 0.0
      %613 = vmatprep.subr.mxu0 0.0
      %614 = vmatpush1.msra.mxu0 0.0
      %615 = vmatprep.subr.mxu0 0.0
      %616 = vmatpush1.msra.mxu0 0.0
      %617 = vmatprep.subr.mxu0 0.0
      %618 = vmatpush1.msra.mxu0 0.0
      %619 = vmatprep.subr.mxu0 0.0
      %620 = vmatpush1.msra.mxu0 0.0
      %621 = vmatprep.subr.mxu0 0.0
      %622 = vmatpush1.msra.mxu0 0.0
      %623 = vmatprep.subr.mxu0 0.0
      %624 = vmatpush1.msra.mxu0 0.0
      %625 = vmatprep.subr.mxu0 0.0
      %626 = vmatpush1.msra.mxu0 0.0
      %627 = vmatprep.subr.mxu0 0.0
      %628 = vmatpush1.msra.mxu0 0.0
      %629 = vmatprep.subr.mxu0 0.0
      %630 = vmatpush1.msra.mxu0 0.0
      %631 = vmatprep.mubr.f32.mxu0 0.0
      %632 = vmatmul.mubr.f32.gmra.mrb[0].mxu0 %v553
      %v633 = vpop.f32.mrb[0].mxu0
      %v634 = vadd.f32 0.0, %v633
      %v635 = vpop.f32.mrb[0].mxu0
      %636 = vmatprep.mubr.f32.mxu0 0.0
      %637 = vmatmul.mubr.f32.gmra.mrb[0].mxu0 %v556
      %v638 = vpop.f32.mrb[0].mxu0
      %v639 = vadd.f32 0.0, %v638
      %v640 = vpop.f32.mrb[0].mxu0
      %641 = vmatprep.mubr.f32.mxu0 0.0
      %642 = vmatmul.mubr.f32.gmra.mrb[0].mxu0 %v559
      %v643 = vpop.f32.mrb[0].mxu0
      %v644 = vadd.f32 0.0, %v643
      %v645 = vpop.f32.mrb[0].mxu0
      %646 = vmatprep.mubr.f32.mxu0 0.0
      %647 = vmatmul.mubr.f32.gmra.mrb[0].mxu0 %v562
      %v648 = vpop.f32.mrb[0].mxu0
      %v649 = vadd.f32 0.0, %v648
      %v650 = vpop.f32.mrb[0].mxu0
      %651 = vdwg.mxu0
      %v652 = vadd.f32 %v546, %v634
      %v653 = vadd.f32 %v547, %v639
      %v654 = vadd.f32 %v548, %v644
      %v655 = vadd.f32 %v549, %v649
      %656 = vst.msk [vmem:[#allocation2] sm:$0xff] %vm306, %v652
      %657 = vst.msk [vmem:[#allocation2 + $0x8] sm:$0xff] %vm306, %v653
      %658 = vst.msk [vmem:[#allocation2 + $0x10] sm:$0xff] %vm306, %v654
      %659 = vst.msk [vmem:[#allocation2 + $0x18] sm:$0xff] %vm306, %v655
      %s660 = scalar_lea.vmem %s273, 1
      %v661 = vld [vmem:[%s660] ss:$2 sm:$0xff]
      %s662 = scalar_lea.vmem %s273, 49
      %v663 = vld [vmem:[%s662] ss:$2 sm:$0xff]
      %s664 = scalar_lea.vmem %s273, 97
      %v665 = vld [vmem:[%s664] ss:$2 sm:$0xff]
      %s666 = scalar_lea.vmem %s273, 145
      %v667 = vld [vmem:[%s666] ss:$2 sm:$0xff]
      %v668 = vld [vmem:[#allocation2] sm:$0xff]
      %v669 = vld [vmem:[#allocation2 + $0x8] sm:$0xff]
      %v670 = vld [vmem:[#allocation2 + $0x10] sm:$0xff]
      %v671 = vld [vmem:[#allocation2 + $0x18] sm:$0xff]
      %s672 = scalar_lea.vmem %s2, 4
      %v673 = vld [vmem:[%s672] sm:$0xf]
      %v675 = vsel %vm306, %v661, 0
      %v678 = vsel %vm306, %v663, 0
      %v681 = vsel %vm306, %v665, 0
      %v684 = vsel %vm306, %v667, 0
      %v687 = vsel %vm335, %v673, 0
      %689 = vmatprep.subr.mxu0 0.0
      %690 = vmatpush1.msra.mxu0 %v687
      %691 = vmatprep.subr.mxu0 0.0
      %692 = vmatpush1.msra.mxu0 0.0
      %693 = vmatprep.subr.mxu0 0.0
      %694 = vmatpush1.msra.mxu0 0.0
      %695 = vmatprep.subr.mxu0 0.0
      %696 = vmatpush1.msra.mxu0 0.0
      %697 = vmatprep.subr.mxu0 0.0
      %698 = vmatpush1.msra.mxu0 0.0
      %699 = vmatprep.subr.mxu0 0.0
      %700 = vmatpush1.msra.mxu0 0.0
      %701 = vmatprep.subr.mxu0 0.0
      %702 = vmatpush1.msra.mxu0 0.0
      %703 = vmatprep.subr.mxu0 0.0
      %704 = vmatpush1.msra.mxu0 0.0
      %705 = vmatprep.subr.mxu0 0.0
      %706 = vmatpush1.msra.mxu0 0.0
      %707 = vmatprep.subr.mxu0 0.0
      %708 = vmatpush1.msra.mxu0 0.0
      %709 = vmatprep.subr.mxu0 0.0
      %710 = vmatpush1.msra.mxu0 0.0
      %711 = vmatprep.subr.mxu0 0.0
      %712 = vmatpush1.msra.mxu0 0.0
      %713 = vmatprep.subr.mxu0 0.0
      %714 = vmatpush1.msra.mxu0 0.0
      %715 = vmatprep.subr.mxu0 0.0
      %716 = vmatpush1.msra.mxu0 0.0
      %717 = vmatprep.subr.mxu0 0.0
      %718 = vmatpush1.msra.mxu0 0.0
      %719 = vmatprep.subr.mxu0 0.0
      %720 = vmatpush1.msra.mxu0 0.0
      %721 = vmatprep.subr.mxu0 0.0
      %722 = vmatpush1.msra.mxu0 0.0
      %723 = vmatprep.subr.mxu0 0.0
      %724 = vmatpush1.msra.mxu0 0.0
      %725 = vmatprep.subr.mxu0 0.0
      %726 = vmatpush1.msra.mxu0 0.0
      %727 = vmatprep.subr.mxu0 0.0
      %728 = vmatpush1.msra.mxu0 0.0
      %729 = vmatprep.subr.mxu0 0.0
      %730 = vmatpush1.msra.mxu0 0.0
      %731 = vmatprep.subr.mxu0 0.0
      %732 = vmatpush1.msra.mxu0 0.0
      %733 = vmatprep.subr.mxu0 0.0
      %734 = vmatpush1.msra.mxu0 0.0
      %735 = vmatprep.subr.mxu0 0.0
      %736 = vmatpush1.msra.mxu0 0.0
      %737 = vmatprep.subr.mxu0 0.0
      %738 = vmatpush1.msra.mxu0 0.0
      %739 = vmatprep.subr.mxu0 0.0
      %740 = vmatpush1.msra.mxu0 0.0
      %741 = vmatprep.subr.mxu0 0.0
      %742 = vmatpush1.msra.mxu0 0.0
      %743 = vmatprep.subr.mxu0 0.0
      %744 = vmatpush1.msra.mxu0 0.0
      %745 = vmatprep.subr.mxu0 0.0
      %746 = vmatpush1.msra.mxu0 0.0
      %747 = vmatprep.subr.mxu0 0.0
      %748 = vmatpush1.msra.mxu0 0.0
      %749 = vmatprep.subr.mxu0 0.0
      %750 = vmatpush1.msra.mxu0 0.0
      %751 = vmatprep.subr.mxu0 0.0
      %752 = vmatpush1.msra.mxu0 0.0
      %753 = vmatprep.mubr.f32.mxu0 0.0
      %754 = vmatmul.mubr.f32.gmra.mrb[0].mxu0 %v675
      %v755 = vpop.f32.mrb[0].mxu0
      %v756 = vadd.f32 0.0, %v755
      %v757 = vpop.f32.mrb[0].mxu0
      %758 = vmatprep.mubr.f32.mxu0 0.0
      %759 = vmatmul.mubr.f32.gmra.mrb[0].mxu0 %v678
      %v760 = vpop.f32.mrb[0].mxu0
      %v761 = vadd.f32 0.0, %v760
      %v762 = vpop.f32.mrb[0].mxu0
      %763 = vmatprep.mubr.f32.mxu0 0.0
      %764 = vmatmul.mubr.f32.gmra.mrb[0].mxu0 %v681
      %v765 = vpop.f32.mrb[0].mxu0
      %v766 = vadd.f32 0.0, %v765
      %v767 = vpop.f32.mrb[0].mxu0
      %768 = vmatprep.mubr.f32.mxu0 0.0
      %769 = vmatmul.mubr.f32.gmra.mrb[0].mxu0 %v684
      %v770 = vpop.f32.mrb[0].mxu0
      %v771 = vadd.f32 0.0, %v770
      %v772 = vpop.f32.mrb[0].mxu0
      %773 = vdwg.mxu0
      %v774 = vadd.f32 %v668, %v756
      %v775 = vadd.f32 %v669, %v761
      %v776 = vadd.f32 %v670, %v766
      %v777 = vadd.f32 %v671, %v771
      %778 = vst.msk [vmem:[#allocation2] sm:$0xff] %vm306, %v774
      %779 = vst.msk [vmem:[#allocation2 + $0x8] sm:$0xff] %vm306, %v775
      %780 = vst.msk [vmem:[#allocation2 + $0x10] sm:$0xff] %vm306, %v776
      %781 = vst.msk [vmem:[#allocation2 + $0x18] sm:$0xff] %vm306, %v777
      %s782 = scalar_lea.vmem %s288, 1
      %v783 = vld [vmem:[%s782] ss:$2 sm:$0xff]
      %v784 = vld [vmem:[#allocation2] sm:$0xff]
      %v785 = vld [vmem:[#allocation2 + $0x8] sm:$0xff]
      %v786 = vld [vmem:[#allocation2 + $0x10] sm:$0xff]
      %v787 = vld [vmem:[#allocation2 + $0x18] sm:$0xff]
      %s788 = scalar_lea.vmem %s2, 28
      %v789 = vld [vmem:[%s788] sm:$0xf]
      %v791 = vsel %vm306, %v783, 0
      %v794 = vsel %vm335, %v789, 0
      %796 = vmatprep.subr.mxu0 0.0
      %797 = vmatpush1.msra.mxu0 %v794
      %798 = vmatprep.subr.mxu0 0.0
      %799 = vmatpush1.msra.mxu0 0.0
      %800 = vmatprep.subr.mxu0 0.0
      %801 = vmatpush1.msra.mxu0 0.0
      %802 = vmatprep.subr.mxu0 0.0
      %803 = vmatpush1.msra.mxu0 0.0
      %804 = vmatprep.subr.mxu0 0.0
      %805 = vmatpush1.msra.mxu0 0.0
      %806 = vmatprep.subr.mxu0 0.0
      %807 = vmatpush1.msra.mxu0 0.0
      %808 = vmatprep.subr.mxu0 0.0
      %809 = vmatpush1.msra.mxu0 0.0
      %810 = vmatprep.subr.mxu0 0.0
      %811 = vmatpush1.msra.mxu0 0.0
      %812 = vmatprep.subr.mxu0 0.0
      %813 = vmatpush1.msra.mxu0 0.0
      %814 = vmatprep.subr.mxu0 0.0
      %815 = vmatpush1.msra.mxu0 0.0
      %816 = vmatprep.subr.mxu0 0.0
      %817 = vmatpush1.msra.mxu0 0.0
      %818 = vmatprep.subr.mxu0 0.0
      %819 = vmatpush1.msra.mxu0 0.0
      %820 = vmatprep.subr.mxu0 0.0
      %821 = vmatpush1.msra.mxu0 0.0
      %822 = vmatprep.subr.mxu0 0.0
      %823 = vmatpush1.msra.mxu0 0.0
      %824 = vmatprep.subr.mxu0 0.0
      %825 = vmatpush1.msra.mxu0 0.0
      %826 = vmatprep.subr.mxu0 0.0
      %827 = vmatpush1.msra.mxu0 0.0
      %828 = vmatprep.subr.mxu0 0.0
      %829 = vmatpush1.msra.mxu0 0.0
      %830 = vmatprep.subr.mxu0 0.0
      %831 = vmatpush1.msra.mxu0 0.0
      %832 = vmatprep.subr.mxu0 0.0
      %833 = vmatpush1.msra.mxu0 0.0
      %834 = vmatprep.subr.mxu0 0.0
      %835 = vmatpush1.msra.mxu0 0.0
      %836 = vmatprep.subr.mxu0 0.0
      %837 = vmatpush1.msra.mxu0 0.0
      %838 = vmatprep.subr.mxu0 0.0
      %839 = vmatpush1.msra.mxu0 0.0
      %840 = vmatprep.subr.mxu0 0.0
      %841 = vmatpush1.msra.mxu0 0.0
      %842 = vmatprep.subr.mxu0 0.0
      %843 = vmatpush1.msra.mxu0 0.0
      %844 = vmatprep.subr.mxu0 0.0
      %845 = vmatpush1.msra.mxu0 0.0
      %846 = vmatprep.subr.mxu0 0.0
      %847 = vmatpush1.msra.mxu0 0.0
      %848 = vmatprep.subr.mxu0 0.0
      %849 = vmatpush1.msra.mxu0 0.0
      %850 = vmatprep.subr.mxu0 0.0
      %851 = vmatpush1.msra.mxu0 0.0
      %852 = vmatprep.subr.mxu0 0.0
      %853 = vmatpush1.msra.mxu0 0.0
      %854 = vmatprep.subr.mxu0 0.0
      %855 = vmatpush1.msra.mxu0 0.0
      %856 = vmatprep.subr.mxu0 0.0
      %857 = vmatpush1.msra.mxu0 0.0
      %858 = vmatprep.subr.mxu0 0.0
      %859 = vmatpush1.msra.mxu0 0.0
      %860 = vmatprep.mubr.f32.mxu0 0.0
      %861 = vmatmul.mubr.f32.gmra.mrb[0].mxu0 %v678
      %v862 = vpop.f32.mrb[0].mxu0
      %v863 = vadd.f32 0.0, %v862
      %v864 = vpop.f32.mrb[0].mxu0
      %865 = vmatprep.mubr.f32.mxu0 0.0
      %866 = vmatmul.mubr.f32.gmra.mrb[0].mxu0 %v681
      %v867 = vpop.f32.mrb[0].mxu0
      %v868 = vadd.f32 0.0, %v867
      %v869 = vpop.f32.mrb[0].mxu0
      %870 = vmatprep.mubr.f32.mxu0 0.0
      %871 = vmatmul.mubr.f32.gmra.mrb[0].mxu0 %v684
      %v872 = vpop.f32.mrb[0].mxu0
      %v873 = vadd.f32 0.0, %v872
      %v874 = vpop.f32.mrb[0].mxu0
      %875 = vmatprep.mubr.f32.mxu0 0.0
      %876 = vmatmul.mubr.f32.gmra.mrb[0].mxu0 %v791
      %v877 = vpop.f32.mrb[0].mxu0
      %v878 = vadd.f32 0.0, %v877
      %v879 = vpop.f32.mrb[0].mxu0
      %880 = vdwg.mxu0
      %v881 = vadd.f32 %v784, %v863
      %v882 = vadd.f32 %v785, %v868
      %v883 = vadd.f32 %v786, %v873
      %v884 = vadd.f32 %v787, %v878
      %885 = vst.msk [vmem:[#allocation2] sm:$0xff] %vm306, %v881
      %886 = vst.msk [vmem:[#allocation2 + $0x8] sm:$0xff] %vm306, %v882
      %887 = vst.msk [vmem:[#allocation2 + $0x10] sm:$0xff] %vm306, %v883
      %888 = vst.msk [vmem:[#allocation2 + $0x18] sm:$0xff] %vm306, %v884
      %s889 = scalar_lea.vmem %s538, 1
      %v890 = vld [vmem:[%s889] ss:$2 sm:$0xff]
      %s891 = scalar_lea.vmem %s538, 49
      %v892 = vld [vmem:[%s891] ss:$2 sm:$0xff]
      %s893 = scalar_lea.vmem %s538, 97
      %v894 = vld [vmem:[%s893] ss:$2 sm:$0xff]
      %s895 = scalar_lea.vmem %s538, 145
      %v896 = vld [vmem:[%s895] ss:$2 sm:$0xff]
      %v897 = vld [vmem:[#allocation2] sm:$0xff]
      %v898 = vld [vmem:[#allocation2 + $0x8] sm:$0xff]
      %v899 = vld [vmem:[#allocation2 + $0x10] sm:$0xff]
      %v900 = vld [vmem:[#allocation2 + $0x18] sm:$0xff]
      %s901 = scalar_lea.vmem %s2, 16
      %v902 = vld [vmem:[%s901] sm:$0xf]
      %v904 = vsel %vm306, %v890, 0
      %v907 = vsel %vm306, %v892, 0
      %v910 = vsel %vm306, %v894, 0
      %v913 = vsel %vm306, %v896, 0
      %v916 = vsel %vm335, %v902, 0
      %918 = vmatprep.subr.mxu0 0.0
      %919 = vmatpush1.msra.mxu0 %v916
      %920 = vmatprep.subr.mxu0 0.0
      %921 = vmatpush1.msra.mxu0 0.0
      %922 = vmatprep.subr.mxu0 0.0
      %923 = vmatpush1.msra.mxu0 0.0
      %924 = vmatprep.subr.mxu0 0.0
      %925 = vmatpush1.msra.mxu0 0.0
      %926 = vmatprep.subr.mxu0 0.0
      %927 = vmatpush1.msra.mxu0 0.0
      %928 = vmatprep.subr.mxu0 0.0
      %929 = vmatpush1.msra.mxu0 0.0
      %930 = vmatprep.subr.mxu0 0.0
      %931 = vmatpush1.msra.mxu0 0.0
      %932 = vmatprep.subr.mxu0 0.0
      %933 = vmatpush1.msra.mxu0 0.0
      %934 = vmatprep.subr.mxu0 0.0
      %935 = vmatpush1.msra.mxu0 0.0
      %936 = vmatprep.subr.mxu0 0.0
      %937 = vmatpush1.msra.mxu0 0.0
      %938 = vmatprep.subr.mxu0 0.0
      %939 = vmatpush1.msra.mxu0 0.0
      %940 = vmatprep.subr.mxu0 0.0
      %941 = vmatpush1.msra.mxu0 0.0
      %942 = vmatprep.subr.mxu0 0.0
      %943 = vmatpush1.msra.mxu0 0.0
      %944 = vmatprep.subr.mxu0 0.0
      %945 = vmatpush1.msra.mxu0 0.0
      %946 = vmatprep.subr.mxu0 0.0
      %947 = vmatpush1.msra.mxu0 0.0
      %948 = vmatprep.subr.mxu0 0.0
      %949 = vmatpush1.msra.mxu0 0.0
      %950 = vmatprep.subr.mxu0 0.0
      %951 = vmatpush1.msra.mxu0 0.0
      %952 = vmatprep.subr.mxu0 0.0
      %953 = vmatpush1.msra.mxu0 0.0
      %954 = vmatprep.subr.mxu0 0.0
      %955 = vmatpush1.msra.mxu0 0.0
      %956 = vmatprep.subr.mxu0 0.0
      %957 = vmatpush1.msra.mxu0 0.0
      %958 = vmatprep.subr.mxu0 0.0
      %959 = vmatpush1.msra.mxu0 0.0
      %960 = vmatprep.subr.mxu0 0.0
      %961 = vmatpush1.msra.mxu0 0.0
      %962 = vmatprep.subr.mxu0 0.0
      %963 = vmatpush1.msra.mxu0 0.0
      %964 = vmatprep.subr.mxu0 0.0
      %965 = vmatpush1.msra.mxu0 0.0
      %966 = vmatprep.subr.mxu0 0.0
      %967 = vmatpush1.msra.mxu0 0.0
      %968 = vmatprep.subr.mxu0 0.0
      %969 = vmatpush1.msra.mxu0 0.0
      %970 = vmatprep.subr.mxu0 0.0
      %971 = vmatpush1.msra.mxu0 0.0
      %972 = vmatprep.subr.mxu0 0.0
      %973 = vmatpush1.msra.mxu0 0.0
      %974 = vmatprep.subr.mxu0 0.0
      %975 = vmatpush1.msra.mxu0 0.0
      %976 = vmatprep.subr.mxu0 0.0
      %977 = vmatpush1.msra.mxu0 0.0
      %978 = vmatprep.subr.mxu0 0.0
      %979 = vmatpush1.msra.mxu0 0.0
      %980 = vmatprep.subr.mxu0 0.0
      %981 = vmatpush1.msra.mxu0 0.0
      %982 = vmatprep.mubr.f32.mxu0 0.0
      %983 = vmatmul.mubr.f32.gmra.mrb[0].mxu0 %v904
      %v984 = vpop.f32.mrb[0].mxu0
      %v985 = vadd.f32 0.0, %v984
      %v986 = vpop.f32.mrb[0].mxu0
      %987 = vmatprep.mubr.f32.mxu0 0.0
      %988 = vmatmul.mubr.f32.gmra.mrb[0].mxu0 %v907
      %v989 = vpop.f32.mrb[0].mxu0
      %v990 = vadd.f32 0.0, %v989
      %v991 = vpop.f32.mrb[0].mxu0
      %992 = vmatprep.mubr.f32.mxu0 0.0
      %993 = vmatmul.mubr.f32.gmra.mrb[0].mxu0 %v910
      %v994 = vpop.f32.mrb[0].mxu0
      %v995 = vadd.f32 0.0, %v994
      %v996 = vpop.f32.mrb[0].mxu0
      %997 = vmatprep.mubr.f32.mxu0 0.0
      %998 = vmatmul.mubr.f32.gmra.mrb[0].mxu0 %v913
      %v999 = vpop.f32.mrb[0].mxu0
      %v1000 = vadd.f32 0.0, %v999
      %v1001 = vpop.f32.mrb[0].mxu0
      %1002 = vdwg.mxu0
      %v1003 = vadd.f32 %v897, %v985
      %v1004 = vadd.f32 %v898, %v990
      %v1005 = vadd.f32 %v899, %v995
      %v1006 = vadd.f32 %v900, %v1000
      %1007 = vst.msk [vmem:[#allocation2] sm:$0xff] %vm306, %v1003
      %1008 = vst.msk [vmem:[#allocation2 + $0x8] sm:$0xff] %vm306, %v1004
      %1009 = vst.msk [vmem:[#allocation2 + $0x10] sm:$0xff] %vm306, %v1005
      %1010 = vst.msk [vmem:[#allocation2 + $0x18] sm:$0xff] %vm306, %v1006
      %s1011 = scalar_lea.vmem %s273, 2
      %v1012 = vld [vmem:[%s1011] ss:$2 sm:$0xff]
      %s1013 = scalar_lea.vmem %s273, 50
      %v1014 = vld [vmem:[%s1013] ss:$2 sm:$0xff]
      %s1015 = scalar_lea.vmem %s273, 98
      %v1016 = vld [vmem:[%s1015] ss:$2 sm:$0xff]
      %s1017 = scalar_lea.vmem %s273, 146
      %v1018 = vld [vmem:[%s1017] ss:$2 sm:$0xff]
      %v1019 = vld [vmem:[#allocation2] sm:$0xff]
      %v1020 = vld [vmem:[#allocation2 + $0x8] sm:$0xff]
      %v1021 = vld [vmem:[#allocation2 + $0x10] sm:$0xff]
      %v1022 = vld [vmem:[#allocation2 + $0x18] sm:$0xff]
      %s1023 = scalar_lea.vmem %s2, 8
      %v1024 = vld [vmem:[%s1023] sm:$0xf]
      %v1026 = vsel %vm306, %v1012, 0
      %v1029 = vsel %vm306, %v1014, 0
      %v1032 = vsel %vm306, %v1016, 0
      %v1035 = vsel %vm306, %v1018, 0
      %v1038 = vsel %vm335, %v1024, 0
      %1040 = vmatprep.subr.mxu0 0.0
      %1041 = vmatpush1.msra.mxu0 %v1038
      %1042 = vmatprep.subr.mxu0 0.0
      %1043 = vmatpush1.msra.mxu0 0.0
      %1044 = vmatprep.subr.mxu0 0.0
      %1045 = vmatpush1.msra.mxu0 0.0
      %1046 = vmatprep.subr.mxu0 0.0
      %1047 = vmatpush1.msra.mxu0 0.0
      %1048 = vmatprep.subr.mxu0 0.0
      %1049 = vmatpush1.msra.mxu0 0.0
      %1050 = vmatprep.subr.mxu0 0.0
      %1051 = vmatpush1.msra.mxu0 0.0
      %1052 = vmatprep.subr.mxu0 0.0
      %1053 = vmatpush1.msra.mxu0 0.0
      %1054 = vmatprep.subr.mxu0 0.0
      %1055 = vmatpush1.msra.mxu0 0.0
      %1056 = vmatprep.subr.mxu0 0.0
      %1057 = vmatpush1.msra.mxu0 0.0
      %1058 = vmatprep.subr.mxu0 0.0
      %1059 = vmatpush1.msra.mxu0 0.0
      %1060 = vmatprep.subr.mxu0 0.0
      %1061 = vmatpush1.msra.mxu0 0.0
      %1062 = vmatprep.subr.mxu0 0.0
      %1063 = vmatpush1.msra.mxu0 0.0
      %1064 = vmatprep.subr.mxu0 0.0
      %1065 = vmatpush1.msra.mxu0 0.0
      %1066 = vmatprep.subr.mxu0 0.0
      %1067 = vmatpush1.msra.mxu0 0.0
      %1068 = vmatprep.subr.mxu0 0.0
      %1069 = vmatpush1.msra.mxu0 0.0
      %1070 = vmatprep.subr.mxu0 0.0
      %1071 = vmatpush1.msra.mxu0 0.0
      %1072 = vmatprep.subr.mxu0 0.0
      %1073 = vmatpush1.msra.mxu0 0.0
      %1074 = vmatprep.subr.mxu0 0.0
      %1075 = vmatpush1.msra.mxu0 0.0
      %1076 = vmatprep.subr.mxu0 0.0
      %1077 = vmatpush1.msra.mxu0 0.0
      %1078 = vmatprep.subr.mxu0 0.0
      %1079 = vmatpush1.msra.mxu0 0.0
      %1080 = vmatprep.subr.mxu0 0.0
      %1081 = vmatpush1.msra.mxu0 0.0
      %1082 = vmatprep.subr.mxu0 0.0
      %1083 = vmatpush1.msra.mxu0 0.0
      %1084 = vmatprep.subr.mxu0 0.0
      %1085 = vmatpush1.msra.mxu0 0.0
      %1086 = vmatprep.subr.mxu0 0.0
      %1087 = vmatpush1.msra.mxu0 0.0
      %1088 = vmatprep.subr.mxu0 0.0
      %1089 = vmatpush1.msra.mxu0 0.0
      %1090 = vmatprep.subr.mxu0 0.0
      %1091 = vmatpush1.msra.mxu0 0.0
      %1092 = vmatprep.subr.mxu0 0.0
      %1093 = vmatpush1.msra.mxu0 0.0
      %1094 = vmatprep.subr.mxu0 0.0
      %1095 = vmatpush1.msra.mxu0 0.0
      %1096 = vmatprep.subr.mxu0 0.0
      %1097 = vmatpush1.msra.mxu0 0.0
      %1098 = vmatprep.subr.mxu0 0.0
      %1099 = vmatpush1.msra.mxu0 0.0
      %1100 = vmatprep.subr.mxu0 0.0
      %1101 = vmatpush1.msra.mxu0 0.0
      %1102 = vmatprep.subr.mxu0 0.0
      %1103 = vmatpush1.msra.mxu0 0.0
      %1104 = vmatprep.mubr.f32.mxu0 0.0
      %1105 = vmatmul.mubr.f32.gmra.mrb[0].mxu0 %v1026
      %v1106 = vpop.f32.mrb[0].mxu0
      %v1107 = vadd.f32 0.0, %v1106
      %v1108 = vpop.f32.mrb[0].mxu0
      %1109 = vmatprep.mubr.f32.mxu0 0.0
      %1110 = vmatmul.mubr.f32.gmra.mrb[0].mxu0 %v1029
      %v1111 = vpop.f32.mrb[0].mxu0
      %v1112 = vadd.f32 0.0, %v1111
      %v1113 = vpop.f32.mrb[0].mxu0
      %1114 = vmatprep.mubr.f32.mxu0 0.0
      %1115 = vmatmul.mubr.f32.gmra.mrb[0].mxu0 %v1032
      %v1116 = vpop.f32.mrb[0].mxu0
      %v1117 = vadd.f32 0.0, %v1116
      %v1118 = vpop.f32.mrb[0].mxu0
      %1119 = vmatprep.mubr.f32.mxu0 0.0
      %1120 = vmatmul.mubr.f32.gmra.mrb[0].mxu0 %v1035
      %v1121 = vpop.f32.mrb[0].mxu0
      %v1122 = vadd.f32 0.0, %v1121
      %v1123 = vpop.f32.mrb[0].mxu0
      %1124 = vdwg.mxu0
      %v1125 = vadd.f32 %v1019, %v1107
      %v1126 = vadd.f32 %v1020, %v1112
      %v1127 = vadd.f32 %v1021, %v1117
      %v1128 = vadd.f32 %v1022, %v1122
      %1129 = vst.msk [vmem:[#allocation2] sm:$0xff] %vm306, %v1125
      %1130 = vst.msk [vmem:[#allocation2 + $0x8] sm:$0xff] %vm306, %v1126
      %1131 = vst.msk [vmem:[#allocation2 + $0x10] sm:$0xff] %vm306, %v1127
      %1132 = vst.msk [vmem:[#allocation2 + $0x18] sm:$0xff] %vm306, %v1128
      %s1133 = scalar_lea.vmem %s288, 2
      %v1134 = vld [vmem:[%s1133] ss:$2 sm:$0xff]
      %v1135 = vld [vmem:[#allocation2] sm:$0xff]
      %v1136 = vld [vmem:[#allocation2 + $0x8] sm:$0xff]
      %v1137 = vld [vmem:[#allocation2 + $0x10] sm:$0xff]
      %v1138 = vld [vmem:[#allocation2 + $0x18] sm:$0xff]
      %s1139 = scalar_lea.vmem %s2, 32
      %v1140 = vld [vmem:[%s1139] sm:$0xf]
      %v1142 = vsel %vm306, %v1134, 0
      %v1145 = vsel %vm335, %v1140, 0
      %1147 = vmatprep.subr.mxu0 0.0
      %1148 = vmatpush1.msra.mxu0 %v1145
      %1149 = vmatprep.subr.mxu0 0.0
      %1150 = vmatpush1.msra.mxu0 0.0
      %1151 = vmatprep.subr.mxu0 0.0
      %1152 = vmatpush1.msra.mxu0 0.0
      %1153 = vmatprep.subr.mxu0 0.0
      %1154 = vmatpush1.msra.mxu0 0.0
      %1155 = vmatprep.subr.mxu0 0.0
      %1156 = vmatpush1.msra.mxu0 0.0
      %1157 = vmatprep.subr.mxu0 0.0
      %1158 = vmatpush1.msra.mxu0 0.0
      %1159 = vmatprep.subr.mxu0 0.0
      %1160 = vmatpush1.msra.mxu0 0.0
      %1161 = vmatprep.subr.mxu0 0.0
      %1162 = vmatpush1.msra.mxu0 0.0
      %1163 = vmatprep.subr.mxu0 0.0
      %1164 = vmatpush1.msra.mxu0 0.0
      %1165 = vmatprep.subr.mxu0 0.0
      %1166 = vmatpush1.msra.mxu0 0.0
      %1167 = vmatprep.subr.mxu0 0.0
      %1168 = vmatpush1.msra.mxu0 0.0
      %1169 = vmatprep.subr.mxu0 0.0
      %1170 = vmatpush1.msra.mxu0 0.0
      %1171 = vmatprep.subr.mxu0 0.0
      %1172 = vmatpush1.msra.mxu0 0.0
      %1173 = vmatprep.subr.mxu0 0.0
      %1174 = vmatpush1.msra.mxu0 0.0
      %1175 = vmatprep.subr.mxu0 0.0
      %1176 = vmatpush1.msra.mxu0 0.0
      %1177 = vmatprep.subr.mxu0 0.0
      %1178 = vmatpush1.msra.mxu0 0.0
      %1179 = vmatprep.subr.mxu0 0.0
      %1180 = vmatpush1.msra.mxu0 0.0
      %1181 = vmatprep.subr.mxu0 0.0
      %1182 = vmatpush1.msra.mxu0 0.0
      %1183 = vmatprep.subr.mxu0 0.0
      %1184 = vmatpush1.msra.mxu0 0.0
      %1185 = vmatprep.subr.mxu0 0.0
      %1186 = vmatpush1.msra.mxu0 0.0
      %1187 = vmatprep.subr.mxu0 0.0
      %1188 = vmatpush1.msra.mxu0 0.0
      %1189 = vmatprep.subr.mxu0 0.0
      %1190 = vmatpush1.msra.mxu0 0.0
      %1191 = vmatprep.subr.mxu0 0.0
      %1192 = vmatpush1.msra.mxu0 0.0
      %1193 = vmatprep.subr.mxu0 0.0
      %1194 = vmatpush1.msra.mxu0 0.0
      %1195 = vmatprep.subr.mxu0 0.0
      %1196 = vmatpush1.msra.mxu0 0.0
      %1197 = vmatprep.subr.mxu0 0.0
      %1198 = vmatpush1.msra.mxu0 0.0
      %1199 = vmatprep.subr.mxu0 0.0
      %1200 = vmatpush1.msra.mxu0 0.0
      %1201 = vmatprep.subr.mxu0 0.0
      %1202 = vmatpush1.msra.mxu0 0.0
      %1203 = vmatprep.subr.mxu0 0.0
      %1204 = vmatpush1.msra.mxu0 0.0
      %1205 = vmatprep.subr.mxu0 0.0
      %1206 = vmatpush1.msra.mxu0 0.0
      %1207 = vmatprep.subr.mxu0 0.0
      %1208 = vmatpush1.msra.mxu0 0.0
      %1209 = vmatprep.subr.mxu0 0.0
      %1210 = vmatpush1.msra.mxu0 0.0
      %1211 = vmatprep.mubr.f32.mxu0 0.0
      %1212 = vmatmul.mubr.f32.gmra.mrb[0].mxu0 %v1029
      %v1213 = vpop.f32.mrb[0].mxu0
      %v1214 = vadd.f32 0.0, %v1213
      %v1215 = vpop.f32.mrb[0].mxu0
      %1216 = vmatprep.mubr.f32.mxu0 0.0
      %1217 = vmatmul.mubr.f32.gmra.mrb[0].mxu0 %v1032
      %v1218 = vpop.f32.mrb[0].mxu0
      %v1219 = vadd.f32 0.0, %v1218
      %v1220 = vpop.f32.mrb[0].mxu0
      %1221 = vmatprep.mubr.f32.mxu0 0.0
      %1222 = vmatmul.mubr.f32.gmra.mrb[0].mxu0 %v1035
      %v1223 = vpop.f32.mrb[0].mxu0
      %v1224 = vadd.f32 0.0, %v1223
      %v1225 = vpop.f32.mrb[0].mxu0
      %1226 = vmatprep.mubr.f32.mxu0 0.0
      %1227 = vmatmul.mubr.f32.gmra.mrb[0].mxu0 %v1142
      %v1228 = vpop.f32.mrb[0].mxu0
      %v1229 = vadd.f32 0.0, %v1228
      %v1230 = vpop.f32.mrb[0].mxu0
      %1231 = vdwg.mxu0
      %v1232 = vadd.f32 %v1135, %v1214
      %v1233 = vadd.f32 %v1136, %v1219
      %v1234 = vadd.f32 %v1137, %v1224
      %v1235 = vadd.f32 %v1138, %v1229
      %1236 = vst.msk [vmem:[#allocation2] sm:$0xff] %vm306, %v1232
      %1237 = vst.msk [vmem:[#allocation2 + $0x8] sm:$0xff] %vm306, %v1233
      %1238 = vst.msk [vmem:[#allocation2 + $0x10] sm:$0xff] %vm306, %v1234
      %1239 = vst.msk [vmem:[#allocation2 + $0x18] sm:$0xff] %vm306, %v1235
      %s1240 = scalar_lea.vmem %s538, 2
      %v1241 = vld [vmem:[%s1240] ss:$2 sm:$0xff]
      %s1242 = scalar_lea.vmem %s538, 50
      %v1243 = vld [vmem:[%s1242] ss:$2 sm:$0xff]
      %s1244 = scalar_lea.vmem %s538, 98
      %v1245 = vld [vmem:[%s1244] ss:$2 sm:$0xff]
      %s1246 = scalar_lea.vmem %s538, 146
      %v1247 = vld [vmem:[%s1246] ss:$2 sm:$0xff]
      %v1248 = vld [vmem:[#allocation2] sm:$0xff]
      %v1249 = vld [vmem:[#allocation2 + $0x8] sm:$0xff]
      %v1250 = vld [vmem:[#allocation2 + $0x10] sm:$0xff]
      %v1251 = vld [vmem:[#allocation2 + $0x18] sm:$0xff]
      %s1252 = scalar_lea.vmem %s2, 20
      %v1253 = vld [vmem:[%s1252] sm:$0xf]
      %v1255 = vsel %vm306, %v1241, 0
      %v1258 = vsel %vm306, %v1243, 0
      %v1261 = vsel %vm306, %v1245, 0
      %v1264 = vsel %vm306, %v1247, 0
      %v1267 = vsel %vm335, %v1253, 0
      %1269 = vmatprep.subr.mxu0 0.0
      %1270 = vmatpush1.msra.mxu0 %v1267
      %1271 = vmatprep.subr.mxu0 0.0
      %1272 = vmatpush1.msra.mxu0 0.0
      %1273 = vmatprep.subr.mxu0 0.0
      %1274 = vmatpush1.msra.mxu0 0.0
      %1275 = vmatprep.subr.mxu0 0.0
      %1276 = vmatpush1.msra.mxu0 0.0
      %1277 = vmatprep.subr.mxu0 0.0
      %1278 = vmatpush1.msra.mxu0 0.0
      %1279 = vmatprep.subr.mxu0 0.0
      %1280 = vmatpush1.msra.mxu0 0.0
      %1281 = vmatprep.subr.mxu0 0.0
      %1282 = vmatpush1.msra.mxu0 0.0
      %1283 = vmatprep.subr.mxu0 0.0
      %1284 = vmatpush1.msra.mxu0 0.0
      %1285 = vmatprep.subr.mxu0 0.0
      %1286 = vmatpush1.msra.mxu0 0.0
      %1287 = vmatprep.subr.mxu0 0.0
      %1288 = vmatpush1.msra.mxu0 0.0
      %1289 = vmatprep.subr.mxu0 0.0
      %1290 = vmatpush1.msra.mxu0 0.0
      %1291 = vmatprep.subr.mxu0 0.0
      %1292 = vmatpush1.msra.mxu0 0.0
      %1293 = vmatprep.subr.mxu0 0.0
      %1294 = vmatpush1.msra.mxu0 0.0
      %1295 = vmatprep.subr.mxu0 0.0
      %1296 = vmatpush1.msra.mxu0 0.0
      %1297 = vmatprep.subr.mxu0 0.0
      %1298 = vmatpush1.msra.mxu0 0.0
      %1299 = vmatprep.subr.mxu0 0.0
      %1300 = vmatpush1.msra.mxu0 0.0
      %1301 = vmatprep.subr.mxu0 0.0
      %1302 = vmatpush1.msra.mxu0 0.0
      %1303 = vmatprep.subr.mxu0 0.0
      %1304 = vmatpush1.msra.mxu0 0.0
      %1305 = vmatprep.subr.mxu0 0.0
      %1306 = vmatpush1.msra.mxu0 0.0
      %1307 = vmatprep.subr.mxu0 0.0
      %1308 = vmatpush1.msra.mxu0 0.0
      %1309 = vmatprep.subr.mxu0 0.0
      %1310 = vmatpush1.msra.mxu0 0.0
      %1311 = vmatprep.subr.mxu0 0.0
      %1312 = vmatpush1.msra.mxu0 0.0
      %1313 = vmatprep.subr.mxu0 0.0
      %1314 = vmatpush1.msra.mxu0 0.0
      %1315 = vmatprep.subr.mxu0 0.0
      %1316 = vmatpush1.msra.mxu0 0.0
      %1317 = vmatprep.subr.mxu0 0.0
      %1318 = vmatpush1.msra.mxu0 0.0
      %1319 = vmatprep.subr.mxu0 0.0
      %1320 = vmatpush1.msra.mxu0 0.0
      %1321 = vmatprep.subr.mxu0 0.0
      %1322 = vmatpush1.msra.mxu0 0.0
      %1323 = vmatprep.subr.mxu0 0.0
      %1324 = vmatpush1.msra.mxu0 0.0
      %1325 = vmatprep.subr.mxu0 0.0
      %1326 = vmatpush1.msra.mxu0 0.0
      %1327 = vmatprep.subr.mxu0 0.0
      %1328 = vmatpush1.msra.mxu0 0.0
      %1329 = vmatprep.subr.mxu0 0.0
      %1330 = vmatpush1.msra.mxu0 0.0
      %1331 = vmatprep.subr.mxu0 0.0
      %1332 = vmatpush1.msra.mxu0 0.0
      %1333 = vmatprep.mubr.f32.mxu0 0.0
      %1334 = vmatmul.mubr.f32.gmra.mrb[0].mxu0 %v1255
      %v1335 = vpop.f32.mrb[0].mxu0
      %v1336 = vadd.f32 0.0, %v1335
      %v1337 = vpop.f32.mrb[0].mxu0
      %1338 = vmatprep.mubr.f32.mxu0 0.0
      %1339 = vmatmul.mubr.f32.gmra.mrb[0].mxu0 %v1258
      %v1340 = vpop.f32.mrb[0].mxu0
      %v1341 = vadd.f32 0.0, %v1340
      %v1342 = vpop.f32.mrb[0].mxu0
      %1343 = vmatprep.mubr.f32.mxu0 0.0
      %1344 = vmatmul.mubr.f32.gmra.mrb[0].mxu0 %v1261
      %v1345 = vpop.f32.mrb[0].mxu0
      %v1346 = vadd.f32 0.0, %v1345
      %v1347 = vpop.f32.mrb[0].mxu0
      %1348 = vmatprep.mubr.f32.mxu0 0.0
      %1349 = vmatmul.mubr.f32.gmra.mrb[0].mxu0 %v1264
      %v1350 = vpop.f32.mrb[0].mxu0
      %v1351 = vadd.f32 0.0, %v1350
      %v1352 = vpop.f32.mrb[0].mxu0
      %1353 = vdwg.mxu0
      %v1354 = vadd.f32 %v1248, %v1336
      %v1355 = vadd.f32 %v1249, %v1341
      %v1356 = vadd.f32 %v1250, %v1346
      %v1357 = vadd.f32 %v1251, %v1351
      %1358 = vst.msk [vmem:[#allocation2] sm:$0xff] %vm306, %v1354
      %1359 = vst.msk [vmem:[#allocation2 + $0x8] sm:$0xff] %vm306, %v1355
      %1360 = vst.msk [vmem:[#allocation2 + $0x10] sm:$0xff] %vm306, %v1356
      %1361 = vst.msk [vmem:[#allocation2 + $0x18] sm:$0xff] %vm306, %v1357
      %v1362 = vld [vmem:[#allocation2] sm:$0xff]
      %v1363 = vld [vmem:[#allocation2 + $0x8] sm:$0xff]
      %v1364 = vld [vmem:[#allocation2 + $0x10] sm:$0xff]
      %v1365 = vld [vmem:[#allocation2 + $0x18] sm:$0xff]
      %1366 = vst.msk [vmem:[%s297] sm:$0xff] %vm306, %v1362
      %1367 = vst.msk [vmem:[%s297 + $0x8] sm:$0xff] %vm306, %v1363
      %1368 = vst.msk [vmem:[%s297 + $0x10] sm:$0xff] %vm306, %v1364
      %1369 = vst.msk [vmem:[%s297 + $0x18] sm:$0xff] %vm306, %v1365
      %s1370 = smul.u32 4, %s20
      %p1371 = scmp.lt.s32.totalorder %s19, 1
      %s1372 = scalar_select %p1371, %s19, 1
      %p1373 = scmp.lt.s32.totalorder %s1370, 7
      %s1374 = scalar_select %p1373, %s1370, 7
      %s1375 = smul.addr %s1372, 8
      %s1376 = sadd.s32 %s1374, %s1375
      %s1377 = smul.addr %s1376, 8
      %s1378 = scalar_lea.vmem %s4, %s1377
      // Predicated region
      $region37: #{tpu_custom_call.1} parent=35 // pred_check
        %p1379 = pneg %p145
      $region38: #{tpu_custom_call.1} parent=35 // pred_check_branch
        %1381 = sbr.rel (%p1379) target = $region40
      $region39: #{tpu_custom_call.1} parent=35 // pred_region
        %s1382 = smul.u32 4, %s20
      $region40: #{tpu_custom_call.1} parent=35 // pred_fallthru
        _
    $region36: #{tpu_custom_call.1} parent=5 // pred_fallthru
      _
    %p1383 = scmp.le.s32.totalorder 2, %s10
    // Predicated region
    $region41: #{tpu_custom_call.1} parent=5 // pred_check
      %p1384 = pneg %p1383
    $region42: #{tpu_custom_call.1} parent=5 // pred_check_branch
      %1386 = sbr.rel (%p1384) target = $region44
    $region43: #{tpu_custom_call.1} parent=5 // pred_region
      %s1387 = ssub.s32 %s10, 2
      // Predicated region
      $region45: #{tpu_custom_call.1} parent=43 // pred_check
        %p1388 = pneg %p151
      $region46: #{tpu_custom_call.1} parent=43 // pred_check_branch
        %1390 = sbr.rel (%p1388) target = $region48
      $region47: #{tpu_custom_call.1} parent=43 // pred_region
        %s1391 = smul.u32 4, %s22
        %p1392 = scmp.lt.s32.totalorder %s21, 1
        %s1393 = scalar_select %p1392, %s21, 1
        %p1394 = scmp.lt.s32.totalorder %s1391, 7
        %s1395 = scalar_select %p1394, %s1391, 7
        %s1396 = smul.addr %s1393, 8
        %s1397 = sadd.s32 %s1395, %s1396
        %s1398 = smul.addr %s1397, 8
        %s1399 = scalar_lea.vmem %s4, %s1398
      $region48: #{tpu_custom_call.1} parent=43 // pred_fallthru
        _
    $region44: #{tpu_custom_call.1} parent=5 // pred_fallthru
      _
  $region6: #{tpu_custom_call.1} parent=0 // loop_footer
    %s14 = sadd.s32 1, %s10
  $region7: #{tpu_custom_call.1} parent=0 // loop_footer_branch
    %9 = sbr.rel target = $region3
  $region8: #{tpu_custom_call.1} parent=0 // loop_exit
    _

</llo_original>
